<compile_context>
chip_gen: v7x
topology: tpu7x:2x2x1
jax: 0.10.0
libtpu: 0.0.40
codegen_flags: <defaults>
</compile_context>

<pallas_src>
import jax
import jax.numpy as jnp
from jax import lax
from jax.experimental import pallas as pl
from jax.experimental.pallas import tpu as pltpu


# ------------------------------- kernel ------------------------------------ #

def _zero_halo(pad_ref):
    """Zero only the 1-pixel halo of a (B, Hp+2, Wp+2, C) padded scratch."""
    B, Hp2, Wp2, C = pad_ref.shape
    Hp, Wp = Hp2 - 2, Wp2 - 2
    zrow = jnp.zeros((B, 1, Wp2, C), pad_ref.dtype)
    pad_ref[:, 0:1, :, :] = zrow
    pad_ref[:, Hp + 1:Hp + 2, :, :] = zrow
    zcol = jnp.zeros((B, Hp, 1, C), pad_ref.dtype)
    pad_ref[:, 1:Hp + 1, 0:1, :] = zcol
    pad_ref[:, 1:Hp + 1, Wp + 1:Wp + 2, :] = zcol


def contract_kernel(x_ref, w1_ref, b1_ref, w2_ref, b2_ref, o_ref,
                    pad1_ref, pad2_ref, col1_ref, col2_ref):
    # x_ref : (B, H, Wp, 2*Cin)  B images; W folded into pixel pairs on lanes.
    # w1_ref: (9*Cin, C1)   conv1 weight, BN1 scale folded in
    # b1_ref: (1, C1)       folded BN1 bias
    # w2_ref: (9*C1, C2)    conv2 weight, BN2 scale folded in
    # b2_ref: (1, C2)       folded BN2 bias
    # o_ref : (B, Hp, Wp, C2)  dense output block (no lane zero-padding)
    B, H, Wp, C2in = x_ref.shape
    Cin = C2in // 2
    Hp = H // 2
    C1 = w1_ref.shape[1]
    C2 = w2_ref.shape[1]
    M = B * Hp * Wp

    # ---------------- MaxPool2d(2) ----------------
    x = x_ref[...].reshape(B * Hp, 2, Wp, C2in)           # split H rows in pairs
    h = jnp.maximum(x[:, 0], x[:, 1])                     # pool over H
    pooled = jnp.maximum(h[..., :Cin], h[..., Cin:])      # pool over W (lane halves)

    # ---------------- pad=1 (halo-only zero) ----------------
    _zero_halo(pad1_ref)
    pad1_ref[:, 1:Hp + 1, 1:Wp + 1, :] = pooled.reshape(B, Hp, Wp, Cin)

    # ---------------- conv1 (3x3) + BN + ReLU : im2col via col scratch ------
    for t in range(9):
        dy, dx = t // 3, t % 3
        tap = pad1_ref[:, dy:dy + Hp, dx:dx + Wp, :]       # (B, Hp, Wp, Cin)
        col1_ref[:, t * Cin:(t + 1) * Cin] = tap.reshape(M, Cin)
    y1 = jnp.dot(col1_ref[...], w1_ref[...], preferred_element_type=jnp.float32)
    y1 = jnp.maximum(y1 + b1_ref[...], 0.0)                # (M, C1)

    # ---------------- conv2 (3x3) + BN + ReLU -------------------------------
    _zero_halo(pad2_ref)
    pad2_ref[:, 1:Hp + 1, 1:Wp + 1, :] = y1.reshape(B, Hp, Wp, C1)
    for t in range(9):
        dy, dx = t // 3, t % 3
        tap = pad2_ref[:, dy:dy + Hp, dx:dx + Wp, :]       # (B, Hp, Wp, C1)
        col2_ref[:, t * C1:(t + 1) * C1] = tap.reshape(M, C1)
    y2 = jnp.dot(col2_ref[...], w2_ref[...], preferred_element_type=jnp.float32)
    y2 = jnp.maximum(y2 + b2_ref[...], 0.0)                # (M, C2)

    o_ref[...] = y2.reshape(B, Hp, Wp, C2).astype(o_ref.dtype)


# ------------------------------- wrapper ------------------------------------ #

def _pick_images_per_step(n, rows_per_image, target_rows=256, max_rows=2048):
    """Smallest divisor b of n with b*rows >= target (cap M for VMEM)."""
    divisors = [d for d in range(1, n + 1) if n % d == 0]
    b = n
    for d in divisors:
        if d * rows_per_image >= target_rows:
            b = d
            break
    while b > 1 and b * rows_per_image > max_rows:
        b = max(d for d in divisors if d < b)
    return b


def _pad_bytes(shape, itemsize=4, sub=8, lane=128):
    """f32 VMEM footprint with (8,128) tiling on the last two dims."""
    s = list(shape)
    if len(s) >= 1:
        s[-1] = -(-s[-1] // lane) * lane
    if len(s) >= 2:
        s[-2] = -(-s[-2] // sub) * sub
    n = 1
    for d in s:
        n *= d
    return n * itemsize


def contract_forward(x_nchw, p, eps=1e-5):
    N, Cin, H, W = x_nchw.shape
    assert H % 2 == 0 and W % 2 == 0, "even H, W required"
    Hp, Wp = H // 2, W // 2
    C1 = p["w1"].shape[-1]
    C2 = p["w2"].shape[-1]

    # NCHW -> NHWC -> (N, H, Wp, 2*Cin): fold adjacent-W pixel pairs onto the
    # lane axis so the 2x2 pool needs no strided slicing in-kernel.  Narrow
    # lanes here (2*Cin=8) are moot once real Cin >= 64.
    x = jnp.transpose(x_nchw, (0, 2, 3, 1)).reshape(N, H, Wp, 2 * Cin)

    # Fold eval-mode BatchNorm scale/shift into the conv weights (tiny, once).
    s1 = p["g1"] / jnp.sqrt(p["v1"] + eps)
    s2 = p["g2"] / jnp.sqrt(p["v2"] + eps)
    w1f = (p["w1"] * s1).reshape(9 * Cin, C1).astype(jnp.float32)
    b1f = (p["b1"] - p["m1"] * s1).reshape(1, C1).astype(jnp.float32)
    w2f = (p["w2"] * s2).reshape(9 * C1, C2).astype(jnp.float32)
    b2f = (p["b2"] - p["m2"] * s2).reshape(1, C2).astype(jnp.float32)

    B = _pick_images_per_step(N, Hp * Wp)   # images per grid step
    steps = N // B
    M = B * Hp * Wp

    scratch_shapes = [
        pltpu.VMEM((B, Hp + 2, Wp + 2, Cin), jnp.float32),  # padded pooled in
        pltpu.VMEM((B, Hp + 2, Wp + 2, C1), jnp.float32),   # padded conv1 out
        pltpu.VMEM((M, 9 * Cin), jnp.float32),              # conv1 col matrix
        pltpu.VMEM((M, 9 * C1), jnp.float32),               # conv2 col matrix
    ]

    vmem_est = (
        2 * _pad_bytes((B, H, Wp, 2 * Cin))                 # x block, dbl-buf
        + 2 * _pad_bytes((B, Hp, Wp, C2))                   # out block, dbl-buf
        + 2 * (_pad_bytes((9 * Cin, C1)) + _pad_bytes((1, C1))
               + _pad_bytes((9 * C1, C2)) + _pad_bytes((1, C2)))
        + _pad_bytes((B, Hp + 2, Wp + 2, Cin))
        + _pad_bytes((B, Hp + 2, Wp + 2, C1))
        + _pad_bytes((M, 9 * Cin)) + _pad_bytes((M, 9 * C1))
    )
    vmem_limit = int(min(max(4 * vmem_est, 16 * 2**20), 64 * 2**20))

    out = pl.pallas_call(
        contract_kernel,
        out_shape=jax.ShapeDtypeStruct((N, Hp, Wp, C2), jnp.float32),
        grid=(steps,),
        in_specs=[
            pl.BlockSpec((B, H, Wp, 2 * Cin), lambda n: (n, 0, 0, 0)),
            pl.BlockSpec((9 * Cin, C1), lambda n: (0, 0)),
            pl.BlockSpec((1, C1), lambda n: (0, 0)),
            pl.BlockSpec((9 * C1, C2), lambda n: (0, 0)),
            pl.BlockSpec((1, C2), lambda n: (0, 0)),
        ],
        out_specs=pl.BlockSpec((B, Hp, Wp, C2), lambda n: (n, 0, 0, 0)),
        scratch_shapes=scratch_shapes,
        compiler_params=pltpu.CompilerParams(
            dimension_semantics=("parallel",),
            vmem_limit_bytes=vmem_limit),
    )(x, w1f, b1f, w2f, b2f)

    return jnp.transpose(out, (0, 3, 1, 2))                 # NHWC -> NCHW


# ----------------------- deterministic parameter init ----------------------- #

def init_params(key, input_ch, output_ch):
    ks = jax.random.split(key, 10)
    return {
        "w1": 0.1 * jax.random.normal(ks[0], (3, 3, input_ch, output_ch),
                                      jnp.float32),
        "w2": 0.1 * jax.random.normal(ks[1], (3, 3, output_ch, output_ch),
                                      jnp.float32),
        "g1": 1.0 + 0.1 * jax.random.normal(ks[2], (output_ch,), jnp.float32),
        "b1": 0.1 * jax.random.normal(ks[3], (output_ch,), jnp.float32),
        "m1": 0.1 * jax.random.normal(ks[4], (output_ch,), jnp.float32),
        "v1": 0.5 + jnp.abs(jax.random.normal(ks[5], (output_ch,),
                                              jnp.float32)),
        "g2": 1.0 + 0.1 * jax.random.normal(ks[6], (output_ch,), jnp.float32),
        "b2": 0.1 * jax.random.normal(ks[7], (output_ch,), jnp.float32),
        "m2": 0.1 * jax.random.normal(ks[8], (output_ch,), jnp.float32),
        "v2": 0.5 + jnp.abs(jax.random.normal(ks[9], (output_ch,),
                                              jnp.float32)),
    }


# -------------------------------- reference --------------------------------- #

def reference_forward(x_nchw, p, eps=1e-5):
    # pure-JAX reference (eval-mode BN), f32 conv pinned to HIGHEST precision
    x = jnp.transpose(x_nchw, (0, 2, 3, 1))
    x = lax.reduce_window(x, -jnp.inf, lax.max,
                          (1, 2, 2, 1), (1, 2, 2, 1), "VALID")

    def conv_bn_relu(x, w, g, b, m, v):
        y = lax.conv_general_dilated(
            x, w, (1, 1), ((1, 1), (1, 1)),
            dimension_numbers=("NHWC", "HWIO", "NHWC"),
            precision=lax.Precision.HIGHEST)
        y = g * (y - m) / jnp.sqrt(v + eps) + b
        return jnp.maximum(y, 0.0)

    x = conv_bn_relu(x, p["w1"], p["g1"], p["b1"], p["m1"], p["v1"])
    x = conv_bn_relu(x, p["w2"], p["g2"], p["b2"], p["m2"], p["v2"])
    return jnp.transpose(x, (0, 3, 1, 2))


# ---------------------------------- main ------------------------------------ #

if __name__ == "__main__":
    input_ch, output_ch = 4, 8
    key = jax.random.PRNGKey(0)
    kx, kp = jax.random.split(key)

    x = jax.random.normal(kx, (2, input_ch, 16, 16), jnp.float32)  # NCHW
    params = init_params(kp, input_ch, output_ch)

    out = jax.block_until_ready(jax.jit(contract_forward)(x, params))
    ref = jax.block_until_ready(reference_forward(x, params))

    assert out.shape == (2, output_ch, 8, 8), out.shape
    err = float(jnp.max(jnp.abs(out - ref)))
    assert jnp.allclose(out, ref, atol=1e-4, rtol=1e-4), err

    print("KERNEL_OK")
</pallas_src>

<mosaic_0001>
module attributes {stable_mosaic.version = 11 : i64} {
  func.func @contract_kernel(%arg0: i32, %arg1: memref<2x16x8x8xf32, #tpu.memory_space<vmem>>, %arg2: memref<36x8xf32, #tpu.memory_space<vmem>>, %arg3: memref<1x8xf32, #tpu.memory_space<vmem>>, %arg4: memref<72x8xf32, #tpu.memory_space<vmem>>, %arg5: memref<1x8xf32, #tpu.memory_space<vmem>>, %arg6: memref<2x8x8x8xf32, #tpu.memory_space<vmem>>, %arg7: memref<2x10x10x4xf32, #tpu.memory_space<vmem>>, %arg8: memref<2x10x10x8xf32, #tpu.memory_space<vmem>>, %arg9: memref<128x36xf32, #tpu.memory_space<vmem>>, %arg10: memref<128x72xf32, #tpu.memory_space<vmem>>) attributes {dimension_semantics = [#tpu.dimension_semantics<parallel>], iteration_bounds = array<i64: 1>, scalar_prefetch = 0 : i64, scratch_operands = 4 : i64, tpu.core_type = #tpu.core_type<tc>, window_params = [{transform_indices = @transform_0, window_bounds = array<i64: 2, 16, 8, 8>}, {pipeline_mode = #tpu.pipeline_mode<synchronous>, transform_indices = @transform_1, window_bounds = array<i64: 36, 8>}, {pipeline_mode = #tpu.pipeline_mode<synchronous>, transform_indices = @transform_2, window_bounds = array<i64: 1, 8>}, {pipeline_mode = #tpu.pipeline_mode<synchronous>, transform_indices = @transform_3, window_bounds = array<i64: 72, 8>}, {pipeline_mode = #tpu.pipeline_mode<synchronous>, transform_indices = @transform_4, window_bounds = array<i64: 1, 8>}, {transform_indices = @transform_5, window_bounds = array<i64: 2, 8, 8, 8>}]} {
    %c0 = arith.constant 0 : index
    %c0_0 = arith.constant 0 : index
    %c0_1 = arith.constant 0 : index
    %c0_2 = arith.constant 0 : index
    %0 = vector.load %arg1[%c0, %c0_0, %c0_1, %c0_2] : memref<2x16x8x8xf32, #tpu.memory_space<vmem>>, vector<2x16x8x8xf32>
    %1 = vector.shape_cast %0 : vector<2x16x8x8xf32> to vector<16x2x8x8xf32>
    %2 = vector.extract_strided_slice %1 {offsets = [0, 0, 0, 0], sizes = [16, 1, 8, 8], strides = [1, 1, 1, 1]} : vector<16x2x8x8xf32> to vector<16x1x8x8xf32>
    %3 = vector.shape_cast %2 : vector<16x1x8x8xf32> to vector<16x8x8xf32>
    %4 = vector.extract_strided_slice %1 {offsets = [0, 1, 0, 0], sizes = [16, 1, 8, 8], strides = [1, 1, 1, 1]} : vector<16x2x8x8xf32> to vector<16x1x8x8xf32>
    %5 = vector.shape_cast %4 : vector<16x1x8x8xf32> to vector<16x8x8xf32>
    %6 = arith.maximumf %3, %5 : vector<16x8x8xf32>
    %7 = vector.extract_strided_slice %6 {offsets = [0, 0, 0], sizes = [16, 8, 4], strides = [1, 1, 1]} : vector<16x8x8xf32> to vector<16x8x4xf32>
    %8 = vector.extract_strided_slice %6 {offsets = [0, 0, 4], sizes = [16, 8, 4], strides = [1, 1, 1]} : vector<16x8x8xf32> to vector<16x8x4xf32>
    %9 = arith.maximumf %7, %8 : vector<16x8x4xf32>
    %cst = arith.constant 0.000000e+00 : f32
    %10 = vector.broadcast %cst : f32 to vector<2x1x10x4xf32>
    %c0_3 = arith.constant 0 : index
    %c0_4 = arith.constant 0 : index
    %c0_5 = arith.constant 0 : index
    %c0_6 = arith.constant 0 : index
    %11 = vector.load %arg7[%c0_3, %c0_4, %c0_5, %c0_6] : memref<2x10x10x4xf32, #tpu.memory_space<vmem>>, vector<2x1x10x4xf32>
    tpu.vector_store %arg7[%c0_3, %c0_4, %c0_5, %c0_6], %10 {strides = array<i32>} : memref<2x10x10x4xf32, #tpu.memory_space<vmem>>, vector<2x1x10x4xf32>,
    %c0_7 = arith.constant 0 : index
    %c9 = arith.constant 9 : index
    %c0_8 = arith.constant 0 : index
    %c0_9 = arith.constant 0 : index
    %12 = vector.load %arg7[%c0_7, %c9, %c0_8, %c0_9] : memref<2x10x10x4xf32, #tpu.memory_space<vmem>>, vector<2x1x10x4xf32>
    tpu.vector_store %arg7[%c0_7, %c9, %c0_8, %c0_9], %10 {strides = array<i32>} : memref<2x10x10x4xf32, #tpu.memory_space<vmem>>, vector<2x1x10x4xf32>,
    %cst_10 = arith.constant 0.000000e+00 : f32
    %13 = vector.broadcast %cst_10 : f32 to vector<2x8x1x4xf32>
    %c0_11 = arith.constant 0 : index
    %c1 = arith.constant 1 : index
    %c0_12 = arith.constant 0 : index
    %c0_13 = arith.constant 0 : index
    %14 = vector.load %arg7[%c0_11, %c1, %c0_12, %c0_13] : memref<2x10x10x4xf32, #tpu.memory_space<vmem>>, vector<2x8x1x4xf32>
    tpu.vector_store %arg7[%c0_11, %c1, %c0_12, %c0_13], %13 {strides = array<i32>} : memref<2x10x10x4xf32, #tpu.memory_space<vmem>>, vector<2x8x1x4xf32>,
    %c0_14 = arith.constant 0 : index
    %c1_15 = arith.constant 1 : index
    %c9_16 = arith.constant 9 : index
    %c0_17 = arith.constant 0 : index
    %15 = vector.load %arg7[%c0_14, %c1_15, %c9_16, %c0_17] : memref<2x10x10x4xf32, #tpu.memory_space<vmem>>, vector<2x8x1x4xf32>
    tpu.vector_store %arg7[%c0_14, %c1_15, %c9_16, %c0_17], %13 {strides = array<i32>} : memref<2x10x10x4xf32, #tpu.memory_space<vmem>>, vector<2x8x1x4xf32>,
    %16 = vector.shape_cast %9 : vector<16x8x4xf32> to vector<2x8x8x4xf32>
    %c0_18 = arith.constant 0 : index
    %c1_19 = arith.constant 1 : index
    %c1_20 = arith.constant 1 : index
    %c0_21 = arith.constant 0 : index
    %17 = vector.load %arg7[%c0_18, %c1_19, %c1_20, %c0_21] : memref<2x10x10x4xf32, #tpu.memory_space<vmem>>, vector<2x8x8x4xf32>
    tpu.vector_store %arg7[%c0_18, %c1_19, %c1_20, %c0_21], %16 {strides = array<i32>} : memref<2x10x10x4xf32, #tpu.memory_space<vmem>>, vector<2x8x8x4xf32>,
    %c0_22 = arith.constant 0 : index
    %c0_23 = arith.constant 0 : index
    %c0_24 = arith.constant 0 : index
    %c0_25 = arith.constant 0 : index
    %18 = vector.load %arg7[%c0_22, %c0_23, %c0_24, %c0_25] : memref<2x10x10x4xf32, #tpu.memory_space<vmem>>, vector<2x8x8x4xf32>
    %19 = vector.shape_cast %18 : vector<2x8x8x4xf32> to vector<128x4xf32>
    %c0_26 = arith.constant 0 : index
    %c0_27 = arith.constant 0 : index
    %20 = vector.load %arg9[%c0_26, %c0_27] : memref<128x36xf32, #tpu.memory_space<vmem>>, vector<128x4xf32>
    tpu.vector_store %arg9[%c0_26, %c0_27], %19 {strides = array<i32>} : memref<128x36xf32, #tpu.memory_space<vmem>>, vector<128x4xf32>,
    %c0_28 = arith.constant 0 : index
    %c0_29 = arith.constant 0 : index
    %c1_30 = arith.constant 1 : index
    %c0_31 = arith.constant 0 : index
    %21 = vector.load %arg7[%c0_28, %c0_29, %c1_30, %c0_31] : memref<2x10x10x4xf32, #tpu.memory_space<vmem>>, vector<2x8x8x4xf32>
    %22 = vector.shape_cast %21 : vector<2x8x8x4xf32> to vector<128x4xf32>
    %c0_32 = arith.constant 0 : index
    %c4 = arith.constant 4 : index
    %23 = vector.load %arg9[%c0_32, %c4] : memref<128x36xf32, #tpu.memory_space<vmem>>, vector<128x4xf32>
    tpu.vector_store %arg9[%c0_32, %c4], %22 {strides = array<i32>} : memref<128x36xf32, #tpu.memory_space<vmem>>, vector<128x4xf32>,
    %c0_33 = arith.constant 0 : index
    %c0_34 = arith.constant 0 : index
    %c2 = arith.constant 2 : index
    %c0_35 = arith.constant 0 : index
    %24 = vector.load %arg7[%c0_33, %c0_34, %c2, %c0_35] : memref<2x10x10x4xf32, #tpu.memory_space<vmem>>, vector<2x8x8x4xf32>
    %25 = vector.shape_cast %24 : vector<2x8x8x4xf32> to vector<128x4xf32>
    %c0_36 = arith.constant 0 : index
    %c8 = arith.constant 8 : index
    %26 = vector.load %arg9[%c0_36, %c8] : memref<128x36xf32, #tpu.memory_space<vmem>>, vector<128x4xf32>
    tpu.vector_store %arg9[%c0_36, %c8], %25 {strides = array<i32>} : memref<128x36xf32, #tpu.memory_space<vmem>>, vector<128x4xf32>,
    %c0_37 = arith.constant 0 : index
    %c1_38 = arith.constant 1 : index
    %c0_39 = arith.constant 0 : index
    %c0_40 = arith.constant 0 : index
    %27 = vector.load %arg7[%c0_37, %c1_38, %c0_39, %c0_40] : memref<2x10x10x4xf32, #tpu.memory_space<vmem>>, vector<2x8x8x4xf32>
    %28 = vector.shape_cast %27 : vector<2x8x8x4xf32> to vector<128x4xf32>
    %c0_41 = arith.constant 0 : index
    %c12 = arith.constant 12 : index
    %29 = vector.load %arg9[%c0_41, %c12] : memref<128x36xf32, #tpu.memory_space<vmem>>, vector<128x4xf32>
    tpu.vector_store %arg9[%c0_41, %c12], %28 {strides = array<i32>} : memref<128x36xf32, #tpu.memory_space<vmem>>, vector<128x4xf32>,
    %c0_42 = arith.constant 0 : index
    %c1_43 = arith.constant 1 : index
    %c1_44 = arith.constant 1 : index
    %c0_45 = arith.constant 0 : index
    %30 = vector.load %arg7[%c0_42, %c1_43, %c1_44, %c0_45] : memref<2x10x10x4xf32, #tpu.memory_space<vmem>>, vector<2x8x8x4xf32>
    %31 = vector.shape_cast %30 : vector<2x8x8x4xf32> to vector<128x4xf32>
    %c0_46 = arith.constant 0 : index
    %c16 = arith.constant 16 : index
    %32 = vector.load %arg9[%c0_46, %c16] : memref<128x36xf32, #tpu.memory_space<vmem>>, vector<128x4xf32>
    tpu.vector_store %arg9[%c0_46, %c16], %31 {strides = array<i32>} : memref<128x36xf32, #tpu.memory_space<vmem>>, vector<128x4xf32>,
    %c0_47 = arith.constant 0 : index
    %c1_48 = arith.constant 1 : index
    %c2_49 = arith.constant 2 : index
    %c0_50 = arith.constant 0 : index
    %33 = vector.load %arg7[%c0_47, %c1_48, %c2_49, %c0_50] : memref<2x10x10x4xf32, #tpu.memory_space<vmem>>, vector<2x8x8x4xf32>
    %34 = vector.shape_cast %33 : vector<2x8x8x4xf32> to vector<128x4xf32>
    %c0_51 = arith.constant 0 : index
    %c20 = arith.constant 20 : index
    %35 = vector.load %arg9[%c0_51, %c20] : memref<128x36xf32, #tpu.memory_space<vmem>>, vector<128x4xf32>
    tpu.vector_store %arg9[%c0_51, %c20], %34 {strides = array<i32>} : memref<128x36xf32, #tpu.memory_space<vmem>>, vector<128x4xf32>,
    %c0_52 = arith.constant 0 : index
    %c2_53 = arith.constant 2 : index
    %c0_54 = arith.constant 0 : index
    %c0_55 = arith.constant 0 : index
    %36 = vector.load %arg7[%c0_52, %c2_53, %c0_54, %c0_55] : memref<2x10x10x4xf32, #tpu.memory_space<vmem>>, vector<2x8x8x4xf32>
    %37 = vector.shape_cast %36 : vector<2x8x8x4xf32> to vector<128x4xf32>
    %c0_56 = arith.constant 0 : index
    %c24 = arith.constant 24 : index
    %38 = vector.load %arg9[%c0_56, %c24] : memref<128x36xf32, #tpu.memory_space<vmem>>, vector<128x4xf32>
    tpu.vector_store %arg9[%c0_56, %c24], %37 {strides = array<i32>} : memref<128x36xf32, #tpu.memory_space<vmem>>, vector<128x4xf32>,
    %c0_57 = arith.constant 0 : index
    %c2_58 = arith.constant 2 : index
    %c1_59 = arith.constant 1 : index
    %c0_60 = arith.constant 0 : index
    %39 = vector.load %arg7[%c0_57, %c2_58, %c1_59, %c0_60] : memref<2x10x10x4xf32, #tpu.memory_space<vmem>>, vector<2x8x8x4xf32>
    %40 = vector.shape_cast %39 : vector<2x8x8x4xf32> to vector<128x4xf32>
    %c0_61 = arith.constant 0 : index
    %c28 = arith.constant 28 : index
    %41 = vector.load %arg9[%c0_61, %c28] : memref<128x36xf32, #tpu.memory_space<vmem>>, vector<128x4xf32>
    tpu.vector_store %arg9[%c0_61, %c28], %40 {strides = array<i32>} : memref<128x36xf32, #tpu.memory_space<vmem>>, vector<128x4xf32>,
    %c0_62 = arith.constant 0 : index
    %c2_63 = arith.constant 2 : index
    %c2_64 = arith.constant 2 : index
    %c0_65 = arith.constant 0 : index
    %42 = vector.load %arg7[%c0_62, %c2_63, %c2_64, %c0_65] : memref<2x10x10x4xf32, #tpu.memory_space<vmem>>, vector<2x8x8x4xf32>
    %43 = vector.shape_cast %42 : vector<2x8x8x4xf32> to vector<128x4xf32>
    %c0_66 = arith.constant 0 : index
    %c32 = arith.constant 32 : index
    %44 = vector.load %arg9[%c0_66, %c32] : memref<128x36xf32, #tpu.memory_space<vmem>>, vector<128x4xf32>
    tpu.vector_store %arg9[%c0_66, %c32], %43 {strides = array<i32>} : memref<128x36xf32, #tpu.memory_space<vmem>>, vector<128x4xf32>,
    %c0_67 = arith.constant 0 : index
    %c0_68 = arith.constant 0 : index
    %45 = vector.load %arg9[%c0_67, %c0_68] : memref<128x36xf32, #tpu.memory_space<vmem>>, vector<128x36xf32>
    %c0_69 = arith.constant 0 : index
    %c0_70 = arith.constant 0 : index
    %46 = vector.load %arg2[%c0_69, %c0_70] : memref<36x8xf32, #tpu.memory_space<vmem>>, vector<36x8xf32>
    %cst_71 = arith.constant dense<0.000000e+00> : vector<128x8xf32>
    %47 = tpu.matmul %45, %46, %cst_71 {dimension_numbers = #tpu.dot_dimension_numbers<[1], [0], [0], [1], [0, 0, 1, 1], [], []>} : vector<128x36xf32>, vector<36x8xf32>, vector<128x8xf32> -> vector<128x8xf32>
    %c0_72 = arith.constant 0 : index
    %c0_73 = arith.constant 0 : index
    %48 = vector.load %arg3[%c0_72, %c0_73] : memref<1x8xf32, #tpu.memory_space<vmem>>, vector<1x8xf32>
    %49 = vector.broadcast %48 : vector<1x8xf32> to vector<128x8xf32>
    %50 = arith.addf %47, %49 : vector<128x8xf32>
    %cst_74 = arith.constant 0.000000e+00 : f32
    %51 = vector.broadcast %cst_74 : f32 to vector<128x8xf32>
    %52 = arith.maximumf %50, %51 : vector<128x8xf32>
    %cst_75 = arith.constant 0.000000e+00 : f32
    %53 = vector.broadcast %cst_75 : f32 to vector<2x1x10x8xf32>
    %c0_76 = arith.constant 0 : index
    %c0_77 = arith.constant 0 : index
    %c0_78 = arith.constant 0 : index
    %c0_79 = arith.constant 0 : index
    %54 = vector.load %arg8[%c0_76, %c0_77, %c0_78, %c0_79] : memref<2x10x10x8xf32, #tpu.memory_space<vmem>>, vector<2x1x10x8xf32>
    tpu.vector_store %arg8[%c0_76, %c0_77, %c0_78, %c0_79], %53 {strides = array<i32>} : memref<2x10x10x8xf32, #tpu.memory_space<vmem>>, vector<2x1x10x8xf32>,
    %c0_80 = arith.constant 0 : index
    %c9_81 = arith.constant 9 : index
    %c0_82 = arith.constant 0 : index
    %c0_83 = arith.constant 0 : index
    %55 = vector.load %arg8[%c0_80, %c9_81, %c0_82, %c0_83] : memref<2x10x10x8xf32, #tpu.memory_space<vmem>>, vector<2x1x10x8xf32>
    tpu.vector_store %arg8[%c0_80, %c9_81, %c0_82, %c0_83], %53 {strides = array<i32>} : memref<2x10x10x8xf32, #tpu.memory_space<vmem>>, vector<2x1x10x8xf32>,
    %cst_84 = arith.constant 0.000000e+00 : f32
    %56 = vector.broadcast %cst_84 : f32 to vector<2x8x1x8xf32>
    %c0_85 = arith.constant 0 : index
    %c1_86 = arith.constant 1 : index
    %c0_87 = arith.constant 0 : index
    %c0_88 = arith.constant 0 : index
    %57 = vector.load %arg8[%c0_85, %c1_86, %c0_87, %c0_88] : memref<2x10x10x8xf32, #tpu.memory_space<vmem>>, vector<2x8x1x8xf32>
    tpu.vector_store %arg8[%c0_85, %c1_86, %c0_87, %c0_88], %56 {strides = array<i32>} : memref<2x10x10x8xf32, #tpu.memory_space<vmem>>, vector<2x8x1x8xf32>,
    %c0_89 = arith.constant 0 : index
    %c1_90 = arith.constant 1 : index
    %c9_91 = arith.constant 9 : index
    %c0_92 = arith.constant 0 : index
    %58 = vector.load %arg8[%c0_89, %c1_90, %c9_91, %c0_92] : memref<2x10x10x8xf32, #tpu.memory_space<vmem>>, vector<2x8x1x8xf32>
    tpu.vector_store %arg8[%c0_89, %c1_90, %c9_91, %c0_92], %56 {strides = array<i32>} : memref<2x10x10x8xf32, #tpu.memory_space<vmem>>, vector<2x8x1x8xf32>,
    %59 = vector.shape_cast %52 : vector<128x8xf32> to vector<2x8x8x8xf32>
    %c0_93 = arith.constant 0 : index
    %c1_94 = arith.constant 1 : index
    %c1_95 = arith.constant 1 : index
    %c0_96 = arith.constant 0 : index
    %60 = vector.load %arg8[%c0_93, %c1_94, %c1_95, %c0_96] : memref<2x10x10x8xf32, #tpu.memory_space<vmem>>, vector<2x8x8x8xf32>
    tpu.vector_store %arg8[%c0_93, %c1_94, %c1_95, %c0_96], %59 {strides = array<i32>} : memref<2x10x10x8xf32, #tpu.memory_space<vmem>>, vector<2x8x8x8xf32>,
    %c0_97 = arith.constant 0 : index
    %c0_98 = arith.constant 0 : index
    %c0_99 = arith.constant 0 : index
    %c0_100 = arith.constant 0 : index
    %61 = vector.load %arg8[%c0_97, %c0_98, %c0_99, %c0_100] : memref<2x10x10x8xf32, #tpu.memory_space<vmem>>, vector<2x8x8x8xf32>
    %62 = vector.shape_cast %61 : vector<2x8x8x8xf32> to vector<128x8xf32>
    %c0_101 = arith.constant 0 : index
    %c0_102 = arith.constant 0 : index
    %63 = vector.load %arg10[%c0_101, %c0_102] : memref<128x72xf32, #tpu.memory_space<vmem>>, vector<128x8xf32>
    tpu.vector_store %arg10[%c0_101, %c0_102], %62 {strides = array<i32>} : memref<128x72xf32, #tpu.memory_space<vmem>>, vector<128x8xf32>,
    %c0_103 = arith.constant 0 : index
    %c0_104 = arith.constant 0 : index
    %c1_105 = arith.constant 1 : index
    %c0_106 = arith.constant 0 : index
    %64 = vector.load %arg8[%c0_103, %c0_104, %c1_105, %c0_106] : memref<2x10x10x8xf32, #tpu.memory_space<vmem>>, vector<2x8x8x8xf32>
    %65 = vector.shape_cast %64 : vector<2x8x8x8xf32> to vector<128x8xf32>
    %c0_107 = arith.constant 0 : index
    %c8_108 = arith.constant 8 : index
    %66 = vector.load %arg10[%c0_107, %c8_108] : memref<128x72xf32, #tpu.memory_space<vmem>>, vector<128x8xf32>
    tpu.vector_store %arg10[%c0_107, %c8_108], %65 {strides = array<i32>} : memref<128x72xf32, #tpu.memory_space<vmem>>, vector<128x8xf32>,
    %c0_109 = arith.constant 0 : index
    %c0_110 = arith.constant 0 : index
    %c2_111 = arith.constant 2 : index
    %c0_112 = arith.constant 0 : index
    %67 = vector.load %arg8[%c0_109, %c0_110, %c2_111, %c0_112] : memref<2x10x10x8xf32, #tpu.memory_space<vmem>>, vector<2x8x8x8xf32>
    %68 = vector.shape_cast %67 : vector<2x8x8x8xf32> to vector<128x8xf32>
    %c0_113 = arith.constant 0 : index
    %c16_114 = arith.constant 16 : index
    %69 = vector.load %arg10[%c0_113, %c16_114] : memref<128x72xf32, #tpu.memory_space<vmem>>, vector<128x8xf32>
    tpu.vector_store %arg10[%c0_113, %c16_114], %68 {strides = array<i32>} : memref<128x72xf32, #tpu.memory_space<vmem>>, vector<128x8xf32>,
    %c0_115 = arith.constant 0 : index
    %c1_116 = arith.constant 1 : index
    %c0_117 = arith.constant 0 : index
    %c0_118 = arith.constant 0 : index
    %70 = vector.load %arg8[%c0_115, %c1_116, %c0_117, %c0_118] : memref<2x10x10x8xf32, #tpu.memory_space<vmem>>, vector<2x8x8x8xf32>
    %71 = vector.shape_cast %70 : vector<2x8x8x8xf32> to vector<128x8xf32>
    %c0_119 = arith.constant 0 : index
    %c24_120 = arith.constant 24 : index
    %72 = vector.load %arg10[%c0_119, %c24_120] : memref<128x72xf32, #tpu.memory_space<vmem>>, vector<128x8xf32>
    tpu.vector_store %arg10[%c0_119, %c24_120], %71 {strides = array<i32>} : memref<128x72xf32, #tpu.memory_space<vmem>>, vector<128x8xf32>,
    %c0_121 = arith.constant 0 : index
    %c1_122 = arith.constant 1 : index
    %c1_123 = arith.constant 1 : index
    %c0_124 = arith.constant 0 : index
    %73 = vector.load %arg8[%c0_121, %c1_122, %c1_123, %c0_124] : memref<2x10x10x8xf32, #tpu.memory_space<vmem>>, vector<2x8x8x8xf32>
    %74 = vector.shape_cast %73 : vector<2x8x8x8xf32> to vector<128x8xf32>
    %c0_125 = arith.constant 0 : index
    %c32_126 = arith.constant 32 : index
    %75 = vector.load %arg10[%c0_125, %c32_126] : memref<128x72xf32, #tpu.memory_space<vmem>>, vector<128x8xf32>
    tpu.vector_store %arg10[%c0_125, %c32_126], %74 {strides = array<i32>} : memref<128x72xf32, #tpu.memory_space<vmem>>, vector<128x8xf32>,
    %c0_127 = arith.constant 0 : index
    %c1_128 = arith.constant 1 : index
    %c2_129 = arith.constant 2 : index
    %c0_130 = arith.constant 0 : index
    %76 = vector.load %arg8[%c0_127, %c1_128, %c2_129, %c0_130] : memref<2x10x10x8xf32, #tpu.memory_space<vmem>>, vector<2x8x8x8xf32>
    %77 = vector.shape_cast %76 : vector<2x8x8x8xf32> to vector<128x8xf32>
    %c0_131 = arith.constant 0 : index
    %c40 = arith.constant 40 : index
    %78 = vector.load %arg10[%c0_131, %c40] : memref<128x72xf32, #tpu.memory_space<vmem>>, vector<128x8xf32>
    tpu.vector_store %arg10[%c0_131, %c40], %77 {strides = array<i32>} : memref<128x72xf32, #tpu.memory_space<vmem>>, vector<128x8xf32>,
    %c0_132 = arith.constant 0 : index
    %c2_133 = arith.constant 2 : index
    %c0_134 = arith.constant 0 : index
    %c0_135 = arith.constant 0 : index
    %79 = vector.load %arg8[%c0_132, %c2_133, %c0_134, %c0_135] : memref<2x10x10x8xf32, #tpu.memory_space<vmem>>, vector<2x8x8x8xf32>
    %80 = vector.shape_cast %79 : vector<2x8x8x8xf32> to vector<128x8xf32>
    %c0_136 = arith.constant 0 : index
    %c48 = arith.constant 48 : index
    %81 = vector.load %arg10[%c0_136, %c48] : memref<128x72xf32, #tpu.memory_space<vmem>>, vector<128x8xf32>
    tpu.vector_store %arg10[%c0_136, %c48], %80 {strides = array<i32>} : memref<128x72xf32, #tpu.memory_space<vmem>>, vector<128x8xf32>,
    %c0_137 = arith.constant 0 : index
    %c2_138 = arith.constant 2 : index
    %c1_139 = arith.constant 1 : index
    %c0_140 = arith.constant 0 : index
    %82 = vector.load %arg8[%c0_137, %c2_138, %c1_139, %c0_140] : memref<2x10x10x8xf32, #tpu.memory_space<vmem>>, vector<2x8x8x8xf32>
    %83 = vector.shape_cast %82 : vector<2x8x8x8xf32> to vector<128x8xf32>
    %c0_141 = arith.constant 0 : index
    %c56 = arith.constant 56 : index
    %84 = vector.load %arg10[%c0_141, %c56] : memref<128x72xf32, #tpu.memory_space<vmem>>, vector<128x8xf32>
    tpu.vector_store %arg10[%c0_141, %c56], %83 {strides = array<i32>} : memref<128x72xf32, #tpu.memory_space<vmem>>, vector<128x8xf32>,
    %c0_142 = arith.constant 0 : index
    %c2_143 = arith.constant 2 : index
    %c2_144 = arith.constant 2 : index
    %c0_145 = arith.constant 0 : index
    %85 = vector.load %arg8[%c0_142, %c2_143, %c2_144, %c0_145] : memref<2x10x10x8xf32, #tpu.memory_space<vmem>>, vector<2x8x8x8xf32>
    %86 = vector.shape_cast %85 : vector<2x8x8x8xf32> to vector<128x8xf32>
    %c0_146 = arith.constant 0 : index
    %c64 = arith.constant 64 : index
    %87 = vector.load %arg10[%c0_146, %c64] : memref<128x72xf32, #tpu.memory_space<vmem>>, vector<128x8xf32>
    tpu.vector_store %arg10[%c0_146, %c64], %86 {strides = array<i32>} : memref<128x72xf32, #tpu.memory_space<vmem>>, vector<128x8xf32>,
    %c0_147 = arith.constant 0 : index
    %c0_148 = arith.constant 0 : index
    %88 = vector.load %arg10[%c0_147, %c0_148] : memref<128x72xf32, #tpu.memory_space<vmem>>, vector<128x72xf32>
    %c0_149 = arith.constant 0 : index
    %c0_150 = arith.constant 0 : index
    %89 = vector.load %arg4[%c0_149, %c0_150] : memref<72x8xf32, #tpu.memory_space<vmem>>, vector<72x8xf32>
    %cst_151 = arith.constant dense<0.000000e+00> : vector<128x8xf32>
    %90 = tpu.matmul %88, %89, %cst_151 {dimension_numbers = #tpu.dot_dimension_numbers<[1], [0], [0], [1], [0, 0, 1, 1], [], []>} : vector<128x72xf32>, vector<72x8xf32>, vector<128x8xf32> -> vector<128x8xf32>
    %c0_152 = arith.constant 0 : index
    %c0_153 = arith.constant 0 : index
    %91 = vector.load %arg5[%c0_152, %c0_153] : memref<1x8xf32, #tpu.memory_space<vmem>>, vector<1x8xf32>
    %92 = vector.broadcast %91 : vector<1x8xf32> to vector<128x8xf32>
    %93 = arith.addf %90, %92 : vector<128x8xf32>
    %cst_154 = arith.constant 0.000000e+00 : f32
    %94 = vector.broadcast %cst_154 : f32 to vector<128x8xf32>
    %95 = arith.maximumf %93, %94 : vector<128x8xf32>
    %96 = vector.shape_cast %95 : vector<128x8xf32> to vector<2x8x8x8xf32>
    %c0_155 = arith.constant 0 : index
    %c0_156 = arith.constant 0 : index
    %c0_157 = arith.constant 0 : index
    %c0_158 = arith.constant 0 : index
    %97 = vector.load %arg6[%c0_155, %c0_156, %c0_157, %c0_158] : memref<2x8x8x8xf32, #tpu.memory_space<vmem>>, vector<2x8x8x8xf32>
    tpu.vector_store %arg6[%c0_155, %c0_156, %c0_157, %c0_158], %96 {strides = array<i32>} : memref<2x8x8x8xf32, #tpu.memory_space<vmem>>, vector<2x8x8x8xf32>,
    return
  }
  func.func @transform_0(%arg0: i32) -> (i32, i32, i32, i32) {
    %c0_i32 = arith.constant 0 : i32
    %c0_i32_0 = arith.constant 0 : i32
    %c0_i32_1 = arith.constant 0 : i32
    %c0_i32_2 = arith.constant 0 : i32
    return %arg0, %c0_i32, %c0_i32_0, %c0_i32_1 : i32, i32, i32, i32
  }
  func.func @transform_1(%arg0: i32) -> (i32, i32) {
    %c0_i32 = arith.constant 0 : i32
    %c0_i32_0 = arith.constant 0 : i32
    %c0_i32_1 = arith.constant 0 : i32
    return %c0_i32, %c0_i32_0 : i32, i32
  }
  func.func @transform_2(%arg0: i32) -> (i32, i32) {
    %c0_i32 = arith.constant 0 : i32
    %c0_i32_0 = arith.constant 0 : i32
    %c0_i32_1 = arith.constant 0 : i32
    return %c0_i32, %c0_i32_0 : i32, i32
  }
  func.func @transform_3(%arg0: i32) -> (i32, i32) {
    %c0_i32 = arith.constant 0 : i32
    %c0_i32_0 = arith.constant 0 : i32
    %c0_i32_1 = arith.constant 0 : i32
    return %c0_i32, %c0_i32_0 : i32, i32
  }
  func.func @transform_4(%arg0: i32) -> (i32, i32) {
    %c0_i32 = arith.constant 0 : i32
    %c0_i32_0 = arith.constant 0 : i32
    %c0_i32_1 = arith.constant 0 : i32
    return %c0_i32, %c0_i32_0 : i32, i32
  }
  func.func @transform_5(%arg0: i32) -> (i32, i32, i32, i32) {
    %c0_i32 = arith.constant 0 : i32
    %c0_i32_0 = arith.constant 0 : i32
    %c0_i32_1 = arith.constant 0 : i32
    %c0_i32_2 = arith.constant 0 : i32
    return %arg0, %c0_i32, %c0_i32_0, %c0_i32_1 : i32, i32, i32, i32
  }
}

</mosaic_0001>

<llo_original>
// kernel: contract_forward.1
$region0: #{contract_forward.1}
  #allocation0 [shape = 'u32[]', space=smem, size = 0x4, offset = 0x4, fixed_abs, tag = 'smem constant byte address 0x4 - core index']
  #allocation1 [shape = 'u32[144,128]{1,0:T(1,128)}', space=vmem, size = 0x12000, scoped, tag = 'internal scratch']
  #allocation2 [shape = 'f32[2,10,10,4]{3,2,1,0:T(8,128)}', space=vmem, size = 0x28000, scoped, tag = 'scratch operand']
  #allocation3 [shape = 'f32[2,10,10,8]{3,2,1,0:T(8,128)}', space=vmem, size = 0x28000, scoped, tag = 'scratch operand']
  #allocation4 [shape = 'f32[128,36]{1,0:T(8,128)}', space=vmem, size = 0x10000, scoped, tag = 'scratch operand']
  #allocation5 [shape = 'f32[128,72]{1,0:T(8,128)}', space=vmem, size = 0x10000, scoped, tag = 'scratch operand']
  %s0 = inlined_call_operand.vmem [shape: f32[2,16,8,8], index: 0, kind: input, shape index: {}]
  %s1 = inlined_call_operand.vmem [shape: f32[36,8], index: 1, kind: input, shape index: {}]
  %s2 = inlined_call_operand.vmem [shape: f32[1,8], index: 2, kind: input, shape index: {}]
  %s3 = inlined_call_operand.vmem [shape: f32[72,8], index: 3, kind: input, shape index: {}]
  %s4 = inlined_call_operand.vmem [shape: f32[1,8], index: 4, kind: input, shape index: {}]
  %s5 = inlined_call_operand.vmem [shape: f32[2,8,8,8], index: 5, kind: output, shape index: {}]
  %s6 = sld [smem:[#allocation0]]
  $region30: #{contract_forward.1} parent=0
    _
  %s8 = ssub.s32 1, %s6
  %s9 = scalar_select 0, %s8, %s6
  // Predicated region
  $region2: #{contract_forward.1} parent=0 // pred_check
    _
  $region3: #{contract_forward.1} parent=0 // pred_check_branch
    %11 = sbr.rel (0) target = $region5
  $region4: #{contract_forward.1} parent=0 // pred_region
    _
  $region5: #{contract_forward.1} parent=0 // pred_fallthru
    _
  // Predicated region
  $region6: #{contract_forward.1} parent=0 // pred_check
    _
  $region7: #{contract_forward.1} parent=0 // pred_check_branch
    %13 = sbr.rel (0) target = $region9
  $region8: #{contract_forward.1} parent=0 // pred_region
    _
  $region9: #{contract_forward.1} parent=0 // pred_fallthru
    _
  // Predicated region
  $region10: #{contract_forward.1} parent=0 // pred_check
    _
  $region11: #{contract_forward.1} parent=0 // pred_check_branch
    %15 = sbr.rel (0) target = $region13
  $region12: #{contract_forward.1} parent=0 // pred_region
    _
  $region13: #{contract_forward.1} parent=0 // pred_fallthru
    _
  // Predicated region
  $region14: #{contract_forward.1} parent=0 // pred_check
    _
  $region15: #{contract_forward.1} parent=0 // pred_check_branch
    %17 = sbr.rel (0) target = $region17
  $region16: #{contract_forward.1} parent=0 // pred_region
    _
  $region17: #{contract_forward.1} parent=0 // pred_fallthru
    _
  // Predicated region
  $region18: #{contract_forward.1} parent=0 // pred_check
    _
  $region19: #{contract_forward.1} parent=0 // pred_check_branch
    %19 = sbr.rel (0) target = $region21
  $region20: #{contract_forward.1} parent=0 // pred_region
    _
  $region21: #{contract_forward.1} parent=0 // pred_fallthru
    _
  %v20 = vld [vmem:[%s0] sm:$0xff]
  %v21 = vld [vmem:[%s0 + $0x8] sm:$0xff]
  %v22 = vld [vmem:[%s0 + $0x10] sm:$0xff]
  %v23 = vld [vmem:[%s0 + $0x18] sm:$0xff]
  %v24 = vld [vmem:[%s0 + $0x20] sm:$0xff]
  %v25 = vld [vmem:[%s0 + $0x28] sm:$0xff]
  %v26 = vld [vmem:[%s0 + $0x30] sm:$0xff]
  %v27 = vld [vmem:[%s0 + $0x38] sm:$0xff]
  %v28 = vld [vmem:[%s0 + $0x40] sm:$0xff]
  %v29 = vld [vmem:[%s0 + $0x48] sm:$0xff]
  %v30 = vld [vmem:[%s0 + $0x50] sm:$0xff]
  %v31 = vld [vmem:[%s0 + $0x58] sm:$0xff]
  %v32 = vld [vmem:[%s0 + $0x60] sm:$0xff]
  %v33 = vld [vmem:[%s0 + $0x68] sm:$0xff]
  %v34 = vld [vmem:[%s0 + $0x70] sm:$0xff]
  %v35 = vld [vmem:[%s0 + $0x78] sm:$0xff]
  %v36 = vld [vmem:[%s0 + $0x80] sm:$0xff]
  %v37 = vld [vmem:[%s0 + $0x88] sm:$0xff]
  %v38 = vld [vmem:[%s0 + $0x90] sm:$0xff]
  %v39 = vld [vmem:[%s0 + $0x98] sm:$0xff]
  %v40 = vld [vmem:[%s0 + $0xa0] sm:$0xff]
  %v41 = vld [vmem:[%s0 + $0xa8] sm:$0xff]
  %v42 = vld [vmem:[%s0 + $0xb0] sm:$0xff]
  %v43 = vld [vmem:[%s0 + $0xb8] sm:$0xff]
  %v44 = vld [vmem:[%s0 + $0xc0] sm:$0xff]
  %v45 = vld [vmem:[%s0 + $0xc8] sm:$0xff]
  %v46 = vld [vmem:[%s0 + $0xd0] sm:$0xff]
  %v47 = vld [vmem:[%s0 + $0xd8] sm:$0xff]
  %v48 = vld [vmem:[%s0 + $0xe0] sm:$0xff]
  %v49 = vld [vmem:[%s0 + $0xe8] sm:$0xff]
  %v50 = vld [vmem:[%s0 + $0xf0] sm:$0xff]
  %v51 = vld [vmem:[%s0 + $0xf8] sm:$0xff]
  %v52 = vmax.f32 %v20, %v21
  %v53 = vmax.f32 %v22, %v23
  %v54 = vmax.f32 %v24, %v25
  %v55 = vmax.f32 %v26, %v27
  %v56 = vmax.f32 %v28, %v29
  %v57 = vmax.f32 %v30, %v31
  %v58 = vmax.f32 %v32, %v33
  %v59 = vmax.f32 %v34, %v35
  %v60 = vmax.f32 %v36, %v37
  %v61 = vmax.f32 %v38, %v39
  %v62 = vmax.f32 %v40, %v41
  %v63 = vmax.f32 %v42, %v43
  %v64 = vmax.f32 %v44, %v45
  %v65 = vmax.f32 %v46, %v47
  %v66 = vmax.f32 %v48, %v49
  %v67 = vmax.f32 %v50, %v51
  %84 = vrot.lane.b32.xlu0 %v52, 124
  %v85 = vpop.permute.xlu0 %84
  %86 = vrot.lane.b32.xlu0 %v53, 124
  %v87 = vpop.permute.xlu0 %86
  %88 = vrot.lane.b32.xlu0 %v54, 124
  %v89 = vpop.permute.xlu0 %88
  %90 = vrot.lane.b32.xlu0 %v55, 124
  %v91 = vpop.permute.xlu0 %90
  %92 = vrot.lane.b32.xlu0 %v56, 124
  %v93 = vpop.permute.xlu0 %92
  %94 = vrot.lane.b32.xlu0 %v57, 124
  %v95 = vpop.permute.xlu0 %94
  %96 = vrot.lane.b32.xlu0 %v58, 124
  %v97 = vpop.permute.xlu0 %96
  %98 = vrot.lane.b32.xlu0 %v59, 124
  %v99 = vpop.permute.xlu0 %98
  %100 = vrot.lane.b32.xlu0 %v60, 124
  %v101 = vpop.permute.xlu0 %100
  %102 = vrot.lane.b32.xlu0 %v61, 124
  %v103 = vpop.permute.xlu0 %102
  %104 = vrot.lane.b32.xlu0 %v62, 124
  %v105 = vpop.permute.xlu0 %104
  %106 = vrot.lane.b32.xlu0 %v63, 124
  %v107 = vpop.permute.xlu0 %106
  %108 = vrot.lane.b32.xlu0 %v64, 124
  %v109 = vpop.permute.xlu0 %108
  %110 = vrot.lane.b32.xlu0 %v65, 124
  %v111 = vpop.permute.xlu0 %110
  %112 = vrot.lane.b32.xlu0 %v66, 124
  %v113 = vpop.permute.xlu0 %112
  %114 = vrot.lane.b32.xlu0 %v67, 124
  %v115 = vpop.permute.xlu0 %114
  %v132 = vmax.f32 %v52, %v85
  %v133 = vmax.f32 %v53, %v87
  %v134 = vmax.f32 %v54, %v89
  %v135 = vmax.f32 %v55, %v91
  %v136 = vmax.f32 %v56, %v93
  %v137 = vmax.f32 %v57, %v95
  %v138 = vmax.f32 %v58, %v97
  %v139 = vmax.f32 %v59, %v99
  %v140 = vmax.f32 %v60, %v101
  %v141 = vmax.f32 %v61, %v103
  %v142 = vmax.f32 %v62, %v105
  %v143 = vmax.f32 %v63, %v107
  %v144 = vmax.f32 %v64, %v109
  %v145 = vmax.f32 %v65, %v111
  %v146 = vmax.f32 %v66, %v113
  %v147 = vmax.f32 %v67, %v115
  %vm148 = vcmask 31744
  %149 = vst.msk [vmem:[#allocation2] sm:$0xff] %vm148, 0.0
  %vm150 = vcmask 25600
  %151 = vst.msk [vmem:[#allocation2 + $0x8] sm:$0x3] %vm150, 0.0
  %152 = vst.msk [vmem:[#allocation2 + $0xa0] sm:$0xff] %vm148, 0.0
  %153 = vst.msk [vmem:[#allocation2 + $0xa8] sm:$0x3] %vm150, 0.0
  %s154 = scalar_lea.vmem [#allocation2], 144
  %155 = vst.msk [vmem:[%s154] sm:$0xff] %vm148, 0.0
  %156 = vst.msk [vmem:[%s154 + $0x8] sm:$0x3] %vm150, 0.0
  %157 = vst.msk [vmem:[%s154 + $0xa0] sm:$0xff] %vm148, 0.0
  %158 = vst.msk [vmem:[%s154 + $0xa8] sm:$0x3] %vm150, 0.0
  %s159 = scalar_lea.vmem [#allocation2], 16
  %vm160 = vcmask 24576
  %161 = vst.msk [vmem:[%s159] sm:$0x1] %vm160, 0.0
  %162 = vst.msk [vmem:[%s159 + $0x10] sm:$0x1] %vm160, 0.0
  %163 = vst.msk [vmem:[%s159 + $0x20] sm:$0x1] %vm160, 0.0
  %164 = vst.msk [vmem:[%s159 + $0x30] sm:$0x1] %vm160, 0.0
  %165 = vst.msk [vmem:[%s159 + $0x40] sm:$0x1] %vm160, 0.0
  %166 = vst.msk [vmem:[%s159 + $0x50] sm:$0x1] %vm160, 0.0
  %167 = vst.msk [vmem:[%s159 + $0x60] sm:$0x1] %vm160, 0.0
  %168 = vst.msk [vmem:[%s159 + $0x70] sm:$0x1] %vm160, 0.0
  %169 = vst.msk [vmem:[%s159 + $0xa0] sm:$0x1] %vm160, 0.0
  %170 = vst.msk [vmem:[%s159 + $0xb0] sm:$0x1] %vm160, 0.0
  %171 = vst.msk [vmem:[%s159 + $0xc0] sm:$0x1] %vm160, 0.0
  %172 = vst.msk [vmem:[%s159 + $0xd0] sm:$0x1] %vm160, 0.0
  %173 = vst.msk [vmem:[%s159 + $0xe0] sm:$0x1] %vm160, 0.0
  %174 = vst.msk [vmem:[%s159 + $0xf0] sm:$0x1] %vm160, 0.0
  %175 = vst.msk [vmem:[%s159 + $0x100] sm:$0x1] %vm160, 0.0
  %176 = vst.msk [vmem:[%s159 + $0x110] sm:$0x1] %vm160, 0.0
  %177 = vst.msk [vmem:[%s159 + $0x9] sm:$0x1] %vm160, 0.0
  %178 = vst.msk [vmem:[%s159 + $0x19] sm:$0x1] %vm160, 0.0
  %179 = vst.msk [vmem:[%s159 + $0x29] sm:$0x1] %vm160, 0.0
  %180 = vst.msk [vmem:[%s159 + $0x39] sm:$0x1] %vm160, 0.0
  %181 = vst.msk [vmem:[%s159 + $0x49] sm:$0x1] %vm160, 0.0
  %182 = vst.msk [vmem:[%s159 + $0x59] sm:$0x1] %vm160, 0.0
  %183 = vst.msk [vmem:[%s159 + $0x69] sm:$0x1] %vm160, 0.0
  %184 = vst.msk [vmem:[%s159 + $0x79] sm:$0x1] %vm160, 0.0
  %185 = vst.msk [vmem:[%s159 + $0xa9] sm:$0x1] %vm160, 0.0
  %186 = vst.msk [vmem:[%s159 + $0xb9] sm:$0x1] %vm160, 0.0
  %187 = vst.msk [vmem:[%s159 + $0xc9] sm:$0x1] %vm160, 0.0
  %188 = vst.msk [vmem:[%s159 + $0xd9] sm:$0x1] %vm160, 0.0
  %189 = vst.msk [vmem:[%s159 + $0xe9] sm:$0x1] %vm160, 0.0
  %190 = vst.msk [vmem:[%s159 + $0xf9] sm:$0x1] %vm160, 0.0
  %191 = vst.msk [vmem:[%s159 + $0x109] sm:$0x1] %vm160, 0.0
  %192 = vst.msk [vmem:[%s159 + $0x119] sm:$0x1] %vm160, 0.0
  %193 = vst.msk [vmem:[%s159 + $0x1] sm:$0xff] %vm148, %v132
  %194 = vst.msk [vmem:[%s159 + $0x11] sm:$0xff] %vm148, %v133
  %195 = vst.msk [vmem:[%s159 + $0x21] sm:$0xff] %vm148, %v134
  %196 = vst.msk [vmem:[%s159 + $0x31] sm:$0xff] %vm148, %v135
  %197 = vst.msk [vmem:[%s159 + $0x41] sm:$0xff] %vm148, %v136
  %198 = vst.msk [vmem:[%s159 + $0x51] sm:$0xff] %vm148, %v137
  %199 = vst.msk [vmem:[%s159 + $0x61] sm:$0xff] %vm148, %v138
  %200 = vst.msk [vmem:[%s159 + $0x71] sm:$0xff] %vm148, %v139
  %201 = vst.msk [vmem:[%s159 + $0xa1] sm:$0xff] %vm148, %v140
  %202 = vst.msk [vmem:[%s159 + $0xb1] sm:$0xff] %vm148, %v141
  %203 = vst.msk [vmem:[%s159 + $0xc1] sm:$0xff] %vm148, %v142
  %204 = vst.msk [vmem:[%s159 + $0xd1] sm:$0xff] %vm148, %v143
  %205 = vst.msk [vmem:[%s159 + $0xe1] sm:$0xff] %vm148, %v144
  %206 = vst.msk [vmem:[%s159 + $0xf1] sm:$0xff] %vm148, %v145
  %207 = vst.msk [vmem:[%s159 + $0x101] sm:$0xff] %vm148, %v146
  %208 = vst.msk [vmem:[%s159 + $0x111] sm:$0xff] %vm148, %v147
  %v209 = vld [vmem:[#allocation2] sm:$0xff]
  %v210 = vld [vmem:[#allocation2 + $0x10] sm:$0xff]
  %v211 = vld [vmem:[#allocation2 + $0x20] sm:$0xff]
  %v212 = vld [vmem:[#allocation2 + $0x30] sm:$0xff]
  %v213 = vld [vmem:[#allocation2 + $0x40] sm:$0xff]
  %v214 = vld [vmem:[#allocation2 + $0x50] sm:$0xff]
  %v215 = vld [vmem:[#allocation2 + $0x60] sm:$0xff]
  %v216 = vld [vmem:[#allocation2 + $0x70] sm:$0xff]
  %v217 = vld [vmem:[#allocation2 + $0xa0] sm:$0xff]
  %v218 = vld [vmem:[#allocation2 + $0xb0] sm:$0xff]
  %v219 = vld [vmem:[#allocation2 + $0xc0] sm:$0xff]
  %v220 = vld [vmem:[#allocation2 + $0xd0] sm:$0xff]
  %v221 = vld [vmem:[#allocation2 + $0xe0] sm:$0xff]
  %v222 = vld [vmem:[#allocation2 + $0xf0] sm:$0xff]
  %v223 = vld [vmem:[#allocation2 + $0x100] sm:$0xff]
  %v224 = vld [vmem:[#allocation2 + $0x110] sm:$0xff]
  %225 = vst.msk [vmem:[#allocation4] sm:$0xff] %vm148, %v209
  %226 = vst.msk [vmem:[#allocation4 + $0x8] sm:$0xff] %vm148, %v210
  %227 = vst.msk [vmem:[#allocation4 + $0x10] sm:$0xff] %vm148, %v211
  %228 = vst.msk [vmem:[#allocation4 + $0x18] sm:$0xff] %vm148, %v212
  %229 = vst.msk [vmem:[#allocation4 + $0x20] sm:$0xff] %vm148, %v213
  %230 = vst.msk [vmem:[#allocation4 + $0x28] sm:$0xff] %vm148, %v214
  %231 = vst.msk [vmem:[#allocation4 + $0x30] sm:$0xff] %vm148, %v215
  %232 = vst.msk [vmem:[#allocation4 + $0x38] sm:$0xff] %vm148, %v216
  %233 = vst.msk [vmem:[#allocation4 + $0x40] sm:$0xff] %vm148, %v217
  %234 = vst.msk [vmem:[#allocation4 + $0x48] sm:$0xff] %vm148, %v218
  %235 = vst.msk [vmem:[#allocation4 + $0x50] sm:$0xff] %vm148, %v219
  %236 = vst.msk [vmem:[#allocation4 + $0x58] sm:$0xff] %vm148, %v220
  %237 = vst.msk [vmem:[#allocation4 + $0x60] sm:$0xff] %vm148, %v221
  %238 = vst.msk [vmem:[#allocation4 + $0x68] sm:$0xff] %vm148, %v222
  %239 = vst.msk [vmem:[#allocation4 + $0x70] sm:$0xff] %vm148, %v223
  %240 = vst.msk [vmem:[#allocation4 + $0x78] sm:$0xff] %vm148, %v224
  %v241 = vld [vmem:[#allocation2 + $0x1] sm:$0xff]
  %v242 = vld [vmem:[#allocation2 + $0x11] sm:$0xff]
  %v243 = vld [vmem:[#allocation2 + $0x21] sm:$0xff]
  %v244 = vld [vmem:[#allocation2 + $0x31] sm:$0xff]
  %v245 = vld [vmem:[#allocation2 + $0x41] sm:$0xff]
  %v246 = vld [vmem:[#allocation2 + $0x51] sm:$0xff]
  %v247 = vld [vmem:[#allocation2 + $0x61] sm:$0xff]
  %v248 = vld [vmem:[#allocation2 + $0x71] sm:$0xff]
  %v249 = vld [vmem:[#allocation2 + $0xa1] sm:$0xff]
  %v250 = vld [vmem:[#allocation2 + $0xb1] sm:$0xff]
  %v251 = vld [vmem:[#allocation2 + $0xc1] sm:$0xff]
  %v252 = vld [vmem:[#allocation2 + $0xd1] sm:$0xff]
  %v253 = vld [vmem:[#allocation2 + $0xe1] sm:$0xff]
  %v254 = vld [vmem:[#allocation2 + $0xf1] sm:$0xff]
  %v255 = vld [vmem:[#allocation2 + $0x101] sm:$0xff]
  %v256 = vld [vmem:[#allocation2 + $0x111] sm:$0xff]
  %273 = vrot.lane.b32.xlu0 %v241, 4
  %v274 = vpop.permute.xlu0 %273
  %275 = vrot.lane.b32.xlu0 %v242, 4
  %v276 = vpop.permute.xlu0 %275
  %277 = vrot.lane.b32.xlu0 %v243, 4
  %v278 = vpop.permute.xlu0 %277
  %279 = vrot.lane.b32.xlu0 %v244, 4
  %v280 = vpop.permute.xlu0 %279
  %281 = vrot.lane.b32.xlu0 %v245, 4
  %v282 = vpop.permute.xlu0 %281
  %283 = vrot.lane.b32.xlu0 %v246, 4
  %v284 = vpop.permute.xlu0 %283
  %285 = vrot.lane.b32.xlu0 %v247, 4
  %v286 = vpop.permute.xlu0 %285
  %287 = vrot.lane.b32.xlu0 %v248, 4
  %v288 = vpop.permute.xlu0 %287
  %289 = vrot.lane.b32.xlu0 %v249, 4
  %v290 = vpop.permute.xlu0 %289
  %291 = vrot.lane.b32.xlu0 %v250, 4
  %v292 = vpop.permute.xlu0 %291
  %293 = vrot.lane.b32.xlu0 %v251, 4
  %v294 = vpop.permute.xlu0 %293
  %295 = vrot.lane.b32.xlu0 %v252, 4
  %v296 = vpop.permute.xlu0 %295
  %297 = vrot.lane.b32.xlu0 %v253, 4
  %v298 = vpop.permute.xlu0 %297
  %299 = vrot.lane.b32.xlu0 %v254, 4
  %v300 = vpop.permute.xlu0 %299
  %301 = vrot.lane.b32.xlu0 %v255, 4
  %v302 = vpop.permute.xlu0 %301
  %303 = vrot.lane.b32.xlu0 %v256, 4
  %v304 = vpop.permute.xlu0 %303
  %vm321 = vcmask 64544
  %322 = vst.msk [vmem:[#allocation4] sm:$0xff] %vm321, %v274
  %323 = vst.msk [vmem:[#allocation4 + $0x8] sm:$0xff] %vm321, %v276
  %324 = vst.msk [vmem:[#allocation4 + $0x10] sm:$0xff] %vm321, %v278
  %325 = vst.msk [vmem:[#allocation4 + $0x18] sm:$0xff] %vm321, %v280
  %326 = vst.msk [vmem:[#allocation4 + $0x20] sm:$0xff] %vm321, %v282
  %327 = vst.msk [vmem:[#allocation4 + $0x28] sm:$0xff] %vm321, %v284
  %328 = vst.msk [vmem:[#allocation4 + $0x30] sm:$0xff] %vm321, %v286
  %329 = vst.msk [vmem:[#allocation4 + $0x38] sm:$0xff] %vm321, %v288
  %330 = vst.msk [vmem:[#allocation4 + $0x40] sm:$0xff] %vm321, %v290
  %331 = vst.msk [vmem:[#allocation4 + $0x48] sm:$0xff] %vm321, %v292
  %332 = vst.msk [vmem:[#allocation4 + $0x50] sm:$0xff] %vm321, %v294
  %333 = vst.msk [vmem:[#allocation4 + $0x58] sm:$0xff] %vm321, %v296
  %334 = vst.msk [vmem:[#allocation4 + $0x60] sm:$0xff] %vm321, %v298
  %335 = vst.msk [vmem:[#allocation4 + $0x68] sm:$0xff] %vm321, %v300
  %336 = vst.msk [vmem:[#allocation4 + $0x70] sm:$0xff] %vm321, %v302
  %337 = vst.msk [vmem:[#allocation4 + $0x78] sm:$0xff] %vm321, %v304
  %v338 = vld [vmem:[#allocation2 + $0x2] sm:$0xff]
  %v339 = vld [vmem:[#allocation2 + $0x12] sm:$0xff]
  %v340 = vld [vmem:[#allocation2 + $0x22] sm:$0xff]
  %v341 = vld [vmem:[#allocation2 + $0x32] sm:$0xff]
  %v342 = vld [vmem:[#allocation2 + $0x42] sm:$0xff]
  %v343 = vld [vmem:[#allocation2 + $0x52] sm:$0xff]
  %v344 = vld [vmem:[#allocation2 + $0x62] sm:$0xff]
  %v345 = vld [vmem:[#allocation2 + $0x72] sm:$0xff]
  %v346 = vld [vmem:[#allocation2 + $0xa2] sm:$0xff]
  %v347 = vld [vmem:[#allocation2 + $0xb2] sm:$0xff]
  %v348 = vld [vmem:[#allocation2 + $0xc2] sm:$0xff]
  %v349 = vld [vmem:[#allocation2 + $0xd2] sm:$0xff]
  %v350 = vld [vmem:[#allocation2 + $0xe2] sm:$0xff]
  %v351 = vld [vmem:[#allocation2 + $0xf2] sm:$0xff]
  %v352 = vld [vmem:[#allocation2 + $0x102] sm:$0xff]
  %v353 = vld [vmem:[#allocation2 + $0x112] sm:$0xff]
  %370 = vrot.lane.b32.xlu0 %v338, 8
  %v371 = vpop.permute.xlu0 %370
  %372 = vrot.lane.b32.xlu0 %v339, 8
  %v373 = vpop.permute.xlu0 %372
  %374 = vrot.lane.b32.xlu0 %v340, 8
  %v375 = vpop.permute.xlu0 %374
  %376 = vrot.lane.b32.xlu0 %v341, 8
  %v377 = vpop.permute.xlu0 %376
  %378 = vrot.lane.b32.xlu0 %v342, 8
  %v379 = vpop.permute.xlu0 %378
  %380 = vrot.lane.b32.xlu0 %v343, 8
  %v381 = vpop.permute.xlu0 %380
  %382 = vrot.lane.b32.xlu0 %v344, 8
  %v383 = vpop.permute.xlu0 %382
  %384 = vrot.lane.b32.xlu0 %v345, 8
  %v385 = vpop.permute.xlu0 %384
  %386 = vrot.lane.b32.xlu0 %v346, 8
  %v387 = vpop.permute.xlu0 %386
  %388 = vrot.lane.b32.xlu0 %v347, 8
  %v389 = vpop.permute.xlu0 %388
  %390 = vrot.lane.b32.xlu0 %v348, 8
  %v391 = vpop.permute.xlu0 %390
  %392 = vrot.lane.b32.xlu0 %v349, 8
  %v393 = vpop.permute.xlu0 %392
  %394 = vrot.lane.b32.xlu0 %v350, 8
  %v395 = vpop.permute.xlu0 %394
  %396 = vrot.lane.b32.xlu0 %v351, 8
  %v397 = vpop.permute.xlu0 %396
  %398 = vrot.lane.b32.xlu0 %v352, 8
  %v399 = vpop.permute.xlu0 %398
  %400 = vrot.lane.b32.xlu0 %v353, 8
  %v401 = vpop.permute.xlu0 %400
  %vm418 = vcmask 97344
  %419 = vst.msk [vmem:[#allocation4] sm:$0xff] %vm418, %v371
  %420 = vst.msk [vmem:[#allocation4 + $0x8] sm:$0xff] %vm418, %v373
  %421 = vst.msk [vmem:[#allocation4 + $0x10] sm:$0xff] %vm418, %v375
  %422 = vst.msk [vmem:[#allocation4 + $0x18] sm:$0xff] %vm418, %v377
  %423 = vst.msk [vmem:[#allocation4 + $0x20] sm:$0xff] %vm418, %v379
  %424 = vst.msk [vmem:[#allocation4 + $0x28] sm:$0xff] %vm418, %v381
  %425 = vst.msk [vmem:[#allocation4 + $0x30] sm:$0xff] %vm418, %v383
  %426 = vst.msk [vmem:[#allocation4 + $0x38] sm:$0xff] %vm418, %v385
  %427 = vst.msk [vmem:[#allocation4 + $0x40] sm:$0xff] %vm418, %v387
  %428 = vst.msk [vmem:[#allocation4 + $0x48] sm:$0xff] %vm418, %v389
  %429 = vst.msk [vmem:[#allocation4 + $0x50] sm:$0xff] %vm418, %v391
  %430 = vst.msk [vmem:[#allocation4 + $0x58] sm:$0xff] %vm418, %v393
  %431 = vst.msk [vmem:[#allocation4 + $0x60] sm:$0xff] %vm418, %v395
  %432 = vst.msk [vmem:[#allocation4 + $0x68] sm:$0xff] %vm418, %v397
  %433 = vst.msk [vmem:[#allocation4 + $0x70] sm:$0xff] %vm418, %v399
  %434 = vst.msk [vmem:[#allocation4 + $0x78] sm:$0xff] %vm418, %v401
  %v435 = vld [vmem:[%s159] sm:$0xff]
  %v436 = vld [vmem:[%s159 + $0x10] sm:$0xff]
  %v437 = vld [vmem:[%s159 + $0x20] sm:$0xff]
  %v438 = vld [vmem:[%s159 + $0x30] sm:$0xff]
  %v439 = vld [vmem:[%s159 + $0x40] sm:$0xff]
  %v440 = vld [vmem:[%s159 + $0x50] sm:$0xff]
  %v441 = vld [vmem:[%s159 + $0x60] sm:$0xff]
  %v442 = vld [vmem:[%s159 + $0x70] sm:$0xff]
  %v443 = vld [vmem:[%s159 + $0xa0] sm:$0xff]
  %v444 = vld [vmem:[%s159 + $0xb0] sm:$0xff]
  %v445 = vld [vmem:[%s159 + $0xc0] sm:$0xff]
  %v446 = vld [vmem:[%s159 + $0xd0] sm:$0xff]
  %v447 = vld [vmem:[%s159 + $0xe0] sm:$0xff]
  %v448 = vld [vmem:[%s159 + $0xf0] sm:$0xff]
  %v449 = vld [vmem:[%s159 + $0x100] sm:$0xff]
  %v450 = vld [vmem:[%s159 + $0x110] sm:$0xff]
  %467 = vrot.lane.b32.xlu0 %v435, 12
  %v468 = vpop.permute.xlu0 %467
  %469 = vrot.lane.b32.xlu0 %v436, 12
  %v470 = vpop.permute.xlu0 %469
  %471 = vrot.lane.b32.xlu0 %v437, 12
  %v472 = vpop.permute.xlu0 %471
  %473 = vrot.lane.b32.xlu0 %v438, 12
  %v474 = vpop.permute.xlu0 %473
  %475 = vrot.lane.b32.xlu0 %v439, 12
  %v476 = vpop.permute.xlu0 %475
  %477 = vrot.lane.b32.xlu0 %v440, 12
  %v478 = vpop.permute.xlu0 %477
  %479 = vrot.lane.b32.xlu0 %v441, 12
  %v480 = vpop.permute.xlu0 %479
  %481 = vrot.lane.b32.xlu0 %v442, 12
  %v482 = vpop.permute.xlu0 %481
  %483 = vrot.lane.b32.xlu0 %v443, 12
  %v484 = vpop.permute.xlu0 %483
  %485 = vrot.lane.b32.xlu0 %v444, 12
  %v486 = vpop.permute.xlu0 %485
  %487 = vrot.lane.b32.xlu0 %v445, 12
  %v488 = vpop.permute.xlu0 %487
  %489 = vrot.lane.b32.xlu0 %v446, 12
  %v490 = vpop.permute.xlu0 %489
  %491 = vrot.lane.b32.xlu0 %v447, 12
  %v492 = vpop.permute.xlu0 %491
  %493 = vrot.lane.b32.xlu0 %v448, 12
  %v494 = vpop.permute.xlu0 %493
  %495 = vrot.lane.b32.xlu0 %v449, 12
  %v496 = vpop.permute.xlu0 %495
  %497 = vrot.lane.b32.xlu0 %v450, 12
  %v498 = vpop.permute.xlu0 %497
  %vm515 = vcmask 130144
  %516 = vst.msk [vmem:[#allocation4] sm:$0xff] %vm515, %v468
  %517 = vst.msk [vmem:[#allocation4 + $0x8] sm:$0xff] %vm515, %v470
  %518 = vst.msk [vmem:[#allocation4 + $0x10] sm:$0xff] %vm515, %v472
  %519 = vst.msk [vmem:[#allocation4 + $0x18] sm:$0xff] %vm515, %v474
  %520 = vst.msk [vmem:[#allocation4 + $0x20] sm:$0xff] %vm515, %v476
  %521 = vst.msk [vmem:[#allocation4 + $0x28] sm:$0xff] %vm515, %v478
  %522 = vst.msk [vmem:[#allocation4 + $0x30] sm:$0xff] %vm515, %v480
  %523 = vst.msk [vmem:[#allocation4 + $0x38] sm:$0xff] %vm515, %v482
  %524 = vst.msk [vmem:[#allocation4 + $0x40] sm:$0xff] %vm515, %v484
  %525 = vst.msk [vmem:[#allocation4 + $0x48] sm:$0xff] %vm515, %v486
  %526 = vst.msk [vmem:[#allocation4 + $0x50] sm:$0xff] %vm515, %v488
  %527 = vst.msk [vmem:[#allocation4 + $0x58] sm:$0xff] %vm515, %v490
  %528 = vst.msk [vmem:[#allocation4 + $0x60] sm:$0xff] %vm515, %v492
  %529 = vst.msk [vmem:[#allocation4 + $0x68] sm:$0xff] %vm515, %v494
  %530 = vst.msk [vmem:[#allocation4 + $0x70] sm:$0xff] %vm515, %v496
  %531 = vst.msk [vmem:[#allocation4 + $0x78] sm:$0xff] %vm515, %v498
  %v532 = vld [vmem:[%s159 + $0x1] sm:$0xff]
  %v533 = vld [vmem:[%s159 + $0x11] sm:$0xff]
  %v534 = vld [vmem:[%s159 + $0x21] sm:$0xff]
  %v535 = vld [vmem:[%s159 + $0x31] sm:$0xff]
  %v536 = vld [vmem:[%s159 + $0x41] sm:$0xff]
  %v537 = vld [vmem:[%s159 + $0x51] sm:$0xff]
  %v538 = vld [vmem:[%s159 + $0x61] sm:$0xff]
  %v539 = vld [vmem:[%s159 + $0x71] sm:$0xff]
  %v540 = vld [vmem:[%s159 + $0xa1] sm:$0xff]
  %v541 = vld [vmem:[%s159 + $0xb1] sm:$0xff]
  %v542 = vld [vmem:[%s159 + $0xc1] sm:$0xff]
  %v543 = vld [vmem:[%s159 + $0xd1] sm:$0xff]
  %v544 = vld [vmem:[%s159 + $0xe1] sm:$0xff]
  %v545 = vld [vmem:[%s159 + $0xf1] sm:$0xff]
  %v546 = vld [vmem:[%s159 + $0x101] sm:$0xff]
  %v547 = vld [vmem:[%s159 + $0x111] sm:$0xff]
  %564 = vrot.lane.b32.xlu0 %v532, 16
  %v565 = vpop.permute.xlu0 %564
  %566 = vrot.lane.b32.xlu0 %v533, 16
  %v567 = vpop.permute.xlu0 %566
  %568 = vrot.lane.b32.xlu0 %v534, 16
  %v569 = vpop.permute.xlu0 %568
  %570 = vrot.lane.b32.xlu0 %v535, 16
  %v571 = vpop.permute.xlu0 %570
  %572 = vrot.lane.b32.xlu0 %v536, 16
  %v573 = vpop.permute.xlu0 %572
  %574 = vrot.lane.b32.xlu0 %v537, 16
  %v575 = vpop.permute.xlu0 %574
  %576 = vrot.lane.b32.xlu0 %v538, 16
  %v577 = vpop.permute.xlu0 %576
  %578 = vrot.lane.b32.xlu0 %v539, 16
  %v579 = vpop.permute.xlu0 %578
  %580 = vrot.lane.b32.xlu0 %v540, 16
  %v581 = vpop.permute.xlu0 %580
  %582 = vrot.lane.b32.xlu0 %v541, 16
  %v583 = vpop.permute.xlu0 %582
  %584 = vrot.lane.b32.xlu0 %v542, 16
  %v585 = vpop.permute.xlu0 %584
  %586 = vrot.lane.b32.xlu0 %v543, 16
  %v587 = vpop.permute.xlu0 %586
  %588 = vrot.lane.b32.xlu0 %v544, 16
  %v589 = vpop.permute.xlu0 %588
  %590 = vrot.lane.b32.xlu0 %v545, 16
  %v591 = vpop.permute.xlu0 %590
  %592 = vrot.lane.b32.xlu0 %v546, 16
  %v593 = vpop.permute.xlu0 %592
  %594 = vrot.lane.b32.xlu0 %v547, 16
  %v595 = vpop.permute.xlu0 %594
  %vm612 = vcmask 162944
  %613 = vst.msk [vmem:[#allocation4] sm:$0xff] %vm612, %v565
  %614 = vst.msk [vmem:[#allocation4 + $0x8] sm:$0xff] %vm612, %v567
  %615 = vst.msk [vmem:[#allocation4 + $0x10] sm:$0xff] %vm612, %v569
  %616 = vst.msk [vmem:[#allocation4 + $0x18] sm:$0xff] %vm612, %v571
  %617 = vst.msk [vmem:[#allocation4 + $0x20] sm:$0xff] %vm612, %v573
  %618 = vst.msk [vmem:[#allocation4 + $0x28] sm:$0xff] %vm612, %v575
  %619 = vst.msk [vmem:[#allocation4 + $0x30] sm:$0xff] %vm612, %v577
  %620 = vst.msk [vmem:[#allocation4 + $0x38] sm:$0xff] %vm612, %v579
  %621 = vst.msk [vmem:[#allocation4 + $0x40] sm:$0xff] %vm612, %v581
  %622 = vst.msk [vmem:[#allocation4 + $0x48] sm:$0xff] %vm612, %v583
  %623 = vst.msk [vmem:[#allocation4 + $0x50] sm:$0xff] %vm612, %v585
  %624 = vst.msk [vmem:[#allocation4 + $0x58] sm:$0xff] %vm612, %v587
  %625 = vst.msk [vmem:[#allocation4 + $0x60] sm:$0xff] %vm612, %v589
  %626 = vst.msk [vmem:[#allocation4 + $0x68] sm:$0xff] %vm612, %v591
  %627 = vst.msk [vmem:[#allocation4 + $0x70] sm:$0xff] %vm612, %v593
  %628 = vst.msk [vmem:[#allocation4 + $0x78] sm:$0xff] %vm612, %v595
  %v629 = vld [vmem:[%s159 + $0x2] sm:$0xff]
  %v630 = vld [vmem:[%s159 + $0x12] sm:$0xff]
  %v631 = vld [vmem:[%s159 + $0x22] sm:$0xff]
  %v632 = vld [vmem:[%s159 + $0x32] sm:$0xff]
  %v633 = vld [vmem:[%s159 + $0x42] sm:$0xff]
  %v634 = vld [vmem:[%s159 + $0x52] sm:$0xff]
  %v635 = vld [vmem:[%s159 + $0x62] sm:$0xff]
  %v636 = vld [vmem:[%s159 + $0x72] sm:$0xff]
  %v637 = vld [vmem:[%s159 + $0xa2] sm:$0xff]
  %v638 = vld [vmem:[%s159 + $0xb2] sm:$0xff]
  %v639 = vld [vmem:[%s159 + $0xc2] sm:$0xff]
  %v640 = vld [vmem:[%s159 + $0xd2] sm:$0xff]
  %v641 = vld [vmem:[%s159 + $0xe2] sm:$0xff]
  %v642 = vld [vmem:[%s159 + $0xf2] sm:$0xff]
  %v643 = vld [vmem:[%s159 + $0x102] sm:$0xff]
  %v644 = vld [vmem:[%s159 + $0x112] sm:$0xff]
  %661 = vrot.lane.b32.xlu0 %v629, 20
  %v662 = vpop.permute.xlu0 %661
  %663 = vrot.lane.b32.xlu0 %v630, 20
  %v664 = vpop.permute.xlu0 %663
  %665 = vrot.lane.b32.xlu0 %v631, 20
  %v666 = vpop.permute.xlu0 %665
  %667 = vrot.lane.b32.xlu0 %v632, 20
  %v668 = vpop.permute.xlu0 %667
  %669 = vrot.lane.b32.xlu0 %v633, 20
  %v670 = vpop.permute.xlu0 %669
  %671 = vrot.lane.b32.xlu0 %v634, 20
  %v672 = vpop.permute.xlu0 %671
  %673 = vrot.lane.b32.xlu0 %v635, 20
  %v674 = vpop.permute.xlu0 %673
  %675 = vrot.lane.b32.xlu0 %v636, 20
  %v676 = vpop.permute.xlu0 %675
  %677 = vrot.lane.b32.xlu0 %v637, 20
  %v678 = vpop.permute.xlu0 %677
  %679 = vrot.lane.b32.xlu0 %v638, 20
  %v680 = vpop.permute.xlu0 %679
  %681 = vrot.lane.b32.xlu0 %v639, 20
  %v682 = vpop.permute.xlu0 %681
  %683 = vrot.lane.b32.xlu0 %v640, 20
  %v684 = vpop.permute.xlu0 %683
  %685 = vrot.lane.b32.xlu0 %v641, 20
  %v686 = vpop.permute.xlu0 %685
  %687 = vrot.lane.b32.xlu0 %v642, 20
  %v688 = vpop.permute.xlu0 %687
  %689 = vrot.lane.b32.xlu0 %v643, 20
  %v690 = vpop.permute.xlu0 %689
  %691 = vrot.lane.b32.xlu0 %v644, 20
  %v692 = vpop.permute.xlu0 %691
  %vm709 = vcmask 195744
  %710 = vst.msk [vmem:[#allocation4] sm:$0xff] %vm709, %v662
  %711 = vst.msk [vmem:[#allocation4 + $0x8] sm:$0xff] %vm709, %v664
  %712 = vst.msk [vmem:[#allocation4 + $0x10] sm:$0xff] %vm709, %v666
  %713 = vst.msk [vmem:[#allocation4 + $0x18] sm:$0xff] %vm709, %v668
  %714 = vst.msk [vmem:[#allocation4 + $0x20] sm:$0xff] %vm709, %v670
  %715 = vst.msk [vmem:[#allocation4 + $0x28] sm:$0xff] %vm709, %v672
  %716 = vst.msk [vmem:[#allocation4 + $0x30] sm:$0xff] %vm709, %v674
  %717 = vst.msk [vmem:[#allocation4 + $0x38] sm:$0xff] %vm709, %v676
  %718 = vst.msk [vmem:[#allocation4 + $0x40] sm:$0xff] %vm709, %v678
  %719 = vst.msk [vmem:[#allocation4 + $0x48] sm:$0xff] %vm709, %v680
  %720 = vst.msk [vmem:[#allocation4 + $0x50] sm:$0xff] %vm709, %v682
  %721 = vst.msk [vmem:[#allocation4 + $0x58] sm:$0xff] %vm709, %v684
  %722 = vst.msk [vmem:[#allocation4 + $0x60] sm:$0xff] %vm709, %v686
  %723 = vst.msk [vmem:[#allocation4 + $0x68] sm:$0xff] %vm709, %v688
  %724 = vst.msk [vmem:[#allocation4 + $0x70] sm:$0xff] %vm709, %v690
  %725 = vst.msk [vmem:[#allocation4 + $0x78] sm:$0xff] %vm709, %v692
  %s726 = scalar_lea.vmem [#allocation2], 32
  %v727 = vld [vmem:[%s726] sm:$0xff]
  %v728 = vld [vmem:[%s726 + $0x10] sm:$0xff]
  %v729 = vld [vmem:[%s726 + $0x20] sm:$0xff]
  %v730 = vld [vmem:[%s726 + $0x30] sm:$0xff]
  %v731 = vld [vmem:[%s726 + $0x40] sm:$0xff]
  %v732 = vld [vmem:[%s726 + $0x50] sm:$0xff]
  %v733 = vld [vmem:[%s726 + $0x60] sm:$0xff]
  %v734 = vld [vmem:[%s726 + $0x70] sm:$0xff]
  %v735 = vld [vmem:[%s726 + $0xa0] sm:$0xff]
  %v736 = vld [vmem:[%s726 + $0xb0] sm:$0xff]
  %v737 = vld [vmem:[%s726 + $0xc0] sm:$0xff]
  %v738 = vld [vmem:[%s726 + $0xd0] sm:$0xff]
  %v739 = vld [vmem:[%s726 + $0xe0] sm:$0xff]
  %v740 = vld [vmem:[%s726 + $0xf0] sm:$0xff]
  %v741 = vld [vmem:[%s726 + $0x100] sm:$0xff]
  %v742 = vld [vmem:[%s726 + $0x110] sm:$0xff]
  %759 = vrot.lane.b32.xlu0 %v727, 24
  %v760 = vpop.permute.xlu0 %759
  %761 = vrot.lane.b32.xlu0 %v728, 24
  %v762 = vpop.permute.xlu0 %761
  %763 = vrot.lane.b32.xlu0 %v729, 24
  %v764 = vpop.permute.xlu0 %763
  %765 = vrot.lane.b32.xlu0 %v730, 24
  %v766 = vpop.permute.xlu0 %765
  %767 = vrot.lane.b32.xlu0 %v731, 24
  %v768 = vpop.permute.xlu0 %767
  %769 = vrot.lane.b32.xlu0 %v732, 24
  %v770 = vpop.permute.xlu0 %769
  %771 = vrot.lane.b32.xlu0 %v733, 24
  %v772 = vpop.permute.xlu0 %771
  %773 = vrot.lane.b32.xlu0 %v734, 24
  %v774 = vpop.permute.xlu0 %773
  %775 = vrot.lane.b32.xlu0 %v735, 24
  %v776 = vpop.permute.xlu0 %775
  %777 = vrot.lane.b32.xlu0 %v736, 24
  %v778 = vpop.permute.xlu0 %777
  %779 = vrot.lane.b32.xlu0 %v737, 24
  %v780 = vpop.permute.xlu0 %779
  %781 = vrot.lane.b32.xlu0 %v738, 24
  %v782 = vpop.permute.xlu0 %781
  %783 = vrot.lane.b32.xlu0 %v739, 24
  %v784 = vpop.permute.xlu0 %783
  %785 = vrot.lane.b32.xlu0 %v740, 24
  %v786 = vpop.permute.xlu0 %785
  %787 = vrot.lane.b32.xlu0 %v741, 24
  %v788 = vpop.permute.xlu0 %787
  %789 = vrot.lane.b32.xlu0 %v742, 24
  %v790 = vpop.permute.xlu0 %789
  %vm807 = vcmask 228544
  %808 = vst.msk [vmem:[#allocation4] sm:$0xff] %vm807, %v760
  %809 = vst.msk [vmem:[#allocation4 + $0x8] sm:$0xff] %vm807, %v762
  %810 = vst.msk [vmem:[#allocation4 + $0x10] sm:$0xff] %vm807, %v764
  %811 = vst.msk [vmem:[#allocation4 + $0x18] sm:$0xff] %vm807, %v766
  %812 = vst.msk [vmem:[#allocation4 + $0x20] sm:$0xff] %vm807, %v768
  %813 = vst.msk [vmem:[#allocation4 + $0x28] sm:$0xff] %vm807, %v770
  %814 = vst.msk [vmem:[#allocation4 + $0x30] sm:$0xff] %vm807, %v772
  %815 = vst.msk [vmem:[#allocation4 + $0x38] sm:$0xff] %vm807, %v774
  %816 = vst.msk [vmem:[#allocation4 + $0x40] sm:$0xff] %vm807, %v776
  %817 = vst.msk [vmem:[#allocation4 + $0x48] sm:$0xff] %vm807, %v778
  %818 = vst.msk [vmem:[#allocation4 + $0x50] sm:$0xff] %vm807, %v780
  %819 = vst.msk [vmem:[#allocation4 + $0x58] sm:$0xff] %vm807, %v782
  %820 = vst.msk [vmem:[#allocation4 + $0x60] sm:$0xff] %vm807, %v784
  %821 = vst.msk [vmem:[#allocation4 + $0x68] sm:$0xff] %vm807, %v786
  %822 = vst.msk [vmem:[#allocation4 + $0x70] sm:$0xff] %vm807, %v788
  %823 = vst.msk [vmem:[#allocation4 + $0x78] sm:$0xff] %vm807, %v790
  %v824 = vld [vmem:[%s726 + $0x1] sm:$0xff]
  %v825 = vld [vmem:[%s726 + $0x11] sm:$0xff]
  %v826 = vld [vmem:[%s726 + $0x21] sm:$0xff]
  %v827 = vld [vmem:[%s726 + $0x31] sm:$0xff]
  %v828 = vld [vmem:[%s726 + $0x41] sm:$0xff]
  %v829 = vld [vmem:[%s726 + $0x51] sm:$0xff]
  %v830 = vld [vmem:[%s726 + $0x61] sm:$0xff]
  %v831 = vld [vmem:[%s726 + $0x71] sm:$0xff]
  %v832 = vld [vmem:[%s726 + $0xa1] sm:$0xff]
  %v833 = vld [vmem:[%s726 + $0xb1] sm:$0xff]
  %v834 = vld [vmem:[%s726 + $0xc1] sm:$0xff]
  %v835 = vld [vmem:[%s726 + $0xd1] sm:$0xff]
  %v836 = vld [vmem:[%s726 + $0xe1] sm:$0xff]
  %v837 = vld [vmem:[%s726 + $0xf1] sm:$0xff]
  %v838 = vld [vmem:[%s726 + $0x101] sm:$0xff]
  %v839 = vld [vmem:[%s726 + $0x111] sm:$0xff]
  %856 = vrot.lane.b32.xlu0 %v824, 28
  %v857 = vpop.permute.xlu0 %856
  %858 = vrot.lane.b32.xlu0 %v825, 28
  %v859 = vpop.permute.xlu0 %858
  %860 = vrot.lane.b32.xlu0 %v826, 28
  %v861 = vpop.permute.xlu0 %860
  %862 = vrot.lane.b32.xlu0 %v827, 28
  %v863 = vpop.permute.xlu0 %862
  %864 = vrot.lane.b32.xlu0 %v828, 28
  %v865 = vpop.permute.xlu0 %864
  %866 = vrot.lane.b32.xlu0 %v829, 28
  %v867 = vpop.permute.xlu0 %866
  %868 = vrot.lane.b32.xlu0 %v830, 28
  %v869 = vpop.permute.xlu0 %868
  %870 = vrot.lane.b32.xlu0 %v831, 28
  %v871 = vpop.permute.xlu0 %870
  %872 = vrot.lane.b32.xlu0 %v832, 28
  %v873 = vpop.permute.xlu0 %872
  %874 = vrot.lane.b32.xlu0 %v833, 28
  %v875 = vpop.permute.xlu0 %874
  %876 = vrot.lane.b32.xlu0 %v834, 28
  %v877 = vpop.permute.xlu0 %876
  %878 = vrot.lane.b32.xlu0 %v835, 28
  %v879 = vpop.permute.xlu0 %878
  %880 = vrot.lane.b32.xlu0 %v836, 28
  %v881 = vpop.permute.xlu0 %880
  %882 = vrot.lane.b32.xlu0 %v837, 28
  %v883 = vpop.permute.xlu0 %882
  %884 = vrot.lane.b32.xlu0 %v838, 28
  %v885 = vpop.permute.xlu0 %884
  %886 = vrot.lane.b32.xlu0 %v839, 28
  %v887 = vpop.permute.xlu0 %886
  %vm904 = vcmask 261344
  %905 = vst.msk [vmem:[#allocation4] sm:$0xff] %vm904, %v857
  %906 = vst.msk [vmem:[#allocation4 + $0x8] sm:$0xff] %vm904, %v859
  %907 = vst.msk [vmem:[#allocation4 + $0x10] sm:$0xff] %vm904, %v861
  %908 = vst.msk [vmem:[#allocation4 + $0x18] sm:$0xff] %vm904, %v863
  %909 = vst.msk [vmem:[#allocation4 + $0x20] sm:$0xff] %vm904, %v865
  %910 = vst.msk [vmem:[#allocation4 + $0x28] sm:$0xff] %vm904, %v867
  %911 = vst.msk [vmem:[#allocation4 + $0x30] sm:$0xff] %vm904, %v869
  %912 = vst.msk [vmem:[#allocation4 + $0x38] sm:$0xff] %vm904, %v871
  %913 = vst.msk [vmem:[#allocation4 + $0x40] sm:$0xff] %vm904, %v873
  %914 = vst.msk [vmem:[#allocation4 + $0x48] sm:$0xff] %vm904, %v875
  %915 = vst.msk [vmem:[#allocation4 + $0x50] sm:$0xff] %vm904, %v877
  %916 = vst.msk [vmem:[#allocation4 + $0x58] sm:$0xff] %vm904, %v879
  %917 = vst.msk [vmem:[#allocation4 + $0x60] sm:$0xff] %vm904, %v881
  %918 = vst.msk [vmem:[#allocation4 + $0x68] sm:$0xff] %vm904, %v883
  %919 = vst.msk [vmem:[#allocation4 + $0x70] sm:$0xff] %vm904, %v885
  %920 = vst.msk [vmem:[#allocation4 + $0x78] sm:$0xff] %vm904, %v887
  %v921 = vld [vmem:[%s726 + $0x2] sm:$0xff]
  %v922 = vld [vmem:[%s726 + $0x12] sm:$0xff]
  %v923 = vld [vmem:[%s726 + $0x22] sm:$0xff]
  %v924 = vld [vmem:[%s726 + $0x32] sm:$0xff]
  %v925 = vld [vmem:[%s726 + $0x42] sm:$0xff]
  %v926 = vld [vmem:[%s726 + $0x52] sm:$0xff]
  %v927 = vld [vmem:[%s726 + $0x62] sm:$0xff]
  %v928 = vld [vmem:[%s726 + $0x72] sm:$0xff]
  %v929 = vld [vmem:[%s726 + $0xa2] sm:$0xff]
  %v930 = vld [vmem:[%s726 + $0xb2] sm:$0xff]
  %v931 = vld [vmem:[%s726 + $0xc2] sm:$0xff]
  %v932 = vld [vmem:[%s726 + $0xd2] sm:$0xff]
  %v933 = vld [vmem:[%s726 + $0xe2] sm:$0xff]
  %v934 = vld [vmem:[%s726 + $0xf2] sm:$0xff]
  %v935 = vld [vmem:[%s726 + $0x102] sm:$0xff]
  %v936 = vld [vmem:[%s726 + $0x112] sm:$0xff]
  %953 = vrot.lane.b32.xlu0 %v921, 32
  %v954 = vpop.permute.xlu0 %953
  %955 = vrot.lane.b32.xlu0 %v922, 32
  %v956 = vpop.permute.xlu0 %955
  %957 = vrot.lane.b32.xlu0 %v923, 32
  %v958 = vpop.permute.xlu0 %957
  %959 = vrot.lane.b32.xlu0 %v924, 32
  %v960 = vpop.permute.xlu0 %959
  %961 = vrot.lane.b32.xlu0 %v925, 32
  %v962 = vpop.permute.xlu0 %961
  %963 = vrot.lane.b32.xlu0 %v926, 32
  %v964 = vpop.permute.xlu0 %963
  %965 = vrot.lane.b32.xlu0 %v927, 32
  %v966 = vpop.permute.xlu0 %965
  %967 = vrot.lane.b32.xlu0 %v928, 32
  %v968 = vpop.permute.xlu0 %967
  %969 = vrot.lane.b32.xlu0 %v929, 32
  %v970 = vpop.permute.xlu0 %969
  %971 = vrot.lane.b32.xlu0 %v930, 32
  %v972 = vpop.permute.xlu0 %971
  %973 = vrot.lane.b32.xlu0 %v931, 32
  %v974 = vpop.permute.xlu0 %973
  %975 = vrot.lane.b32.xlu0 %v932, 32
  %v976 = vpop.permute.xlu0 %975
  %977 = vrot.lane.b32.xlu0 %v933, 32
  %v978 = vpop.permute.xlu0 %977
  %979 = vrot.lane.b32.xlu0 %v934, 32
  %v980 = vpop.permute.xlu0 %979
  %981 = vrot.lane.b32.xlu0 %v935, 32
  %v982 = vpop.permute.xlu0 %981
  %983 = vrot.lane.b32.xlu0 %v936, 32
  %v984 = vpop.permute.xlu0 %983
  %vm1001 = vcmask 294144
  %1002 = vst.msk [vmem:[#allocation4] sm:$0xff] %vm1001, %v954
  %1003 = vst.msk [vmem:[#allocation4 + $0x8] sm:$0xff] %vm1001, %v956
  %1004 = vst.msk [vmem:[#allocation4 + $0x10] sm:$0xff] %vm1001, %v958
  %1005 = vst.msk [vmem:[#allocation4 + $0x18] sm:$0xff] %vm1001, %v960
  %1006 = vst.msk [vmem:[#allocation4 + $0x20] sm:$0xff] %vm1001, %v962
  %1007 = vst.msk [vmem:[#allocation4 + $0x28] sm:$0xff] %vm1001, %v964
  %1008 = vst.msk [vmem:[#allocation4 + $0x30] sm:$0xff] %vm1001, %v966
  %1009 = vst.msk [vmem:[#allocation4 + $0x38] sm:$0xff] %vm1001, %v968
  %1010 = vst.msk [vmem:[#allocation4 + $0x40] sm:$0xff] %vm1001, %v970
  %1011 = vst.msk [vmem:[#allocation4 + $0x48] sm:$0xff] %vm1001, %v972
  %1012 = vst.msk [vmem:[#allocation4 + $0x50] sm:$0xff] %vm1001, %v974
  %1013 = vst.msk [vmem:[#allocation4 + $0x58] sm:$0xff] %vm1001, %v976
  %1014 = vst.msk [vmem:[#allocation4 + $0x60] sm:$0xff] %vm1001, %v978
  %1015 = vst.msk [vmem:[#allocation4 + $0x68] sm:$0xff] %vm1001, %v980
  %1016 = vst.msk [vmem:[#allocation4 + $0x70] sm:$0xff] %vm1001, %v982
  %1017 = vst.msk [vmem:[#allocation4 + $0x78] sm:$0xff] %vm1001, %v984
  %v1018 = vld [vmem:[#allocation4] sm:$0xff]
  %v1019 = vld [vmem:[#allocation4 + $0x8] sm:$0xff]
  %v1020 = vld [vmem:[#allocation4 + $0x10] sm:$0xff]
  %v1021 = vld [vmem:[#allocation4 + $0x18] sm:$0xff]
  %v1022 = vld [vmem:[#allocation4 + $0x20] sm:$0xff]
  %v1023 = vld [vmem:[#allocation4 + $0x28] sm:$0xff]
  %v1024 = vld [vmem:[#allocation4 + $0x30] sm:$0xff]
  %v1025 = vld [vmem:[#allocation4 + $0x38] sm:$0xff]
  %v1026 = vld [vmem:[#allocation4 + $0x40] sm:$0xff]
  %v1027 = vld [vmem:[#allocation4 + $0x48] sm:$0xff]
  %v1028 = vld [vmem:[#allocation4 + $0x50] sm:$0xff]
  %v1029 = vld [vmem:[#allocation4 + $0x58] sm:$0xff]
  %v1030 = vld [vmem:[#allocation4 + $0x60] sm:$0xff]
  %v1031 = vld [vmem:[#allocation4 + $0x68] sm:$0xff]
  %v1032 = vld [vmem:[#allocation4 + $0x70] sm:$0xff]
  %v1033 = vld [vmem:[#allocation4 + $0x78] sm:$0xff]
  %v1034 = vld [vmem:[%s1] sm:$0xff]
  %v1035 = vld [vmem:[%s1 + $0x8] sm:$0xff]
  %v1036 = vld [vmem:[%s1 + $0x10] sm:$0xff]
  %v1037 = vld [vmem:[%s1 + $0x18] sm:$0xff]
  %v1038 = vld [vmem:[%s1 + $0x20] sm:$0xf]
  %v1039 = vld [vmem:[%s2] sm:$0x1]
  %v1041 = vlaneseq
  %v1042 = vshrl.u32 %v1041, 7
  %v1043 = vsub.s32 0, %v1042
  %v1044 = vrot.slane %v1039, %v1043
  %vm1046 = vcmask 293888
  %v1048 = vsel %vm1046, %v1018, 0
  %v1051 = vsel %vm1046, %v1019, 0
  %v1054 = vsel %vm1046, %v1020, 0
  %v1057 = vsel %vm1046, %v1021, 0
  %v1060 = vsel %vm1046, %v1022, 0
  %v1063 = vsel %vm1046, %v1023, 0
  %v1066 = vsel %vm1046, %v1024, 0
  %v1069 = vsel %vm1046, %v1025, 0
  %v1072 = vsel %vm1046, %v1026, 0
  %v1075 = vsel %vm1046, %v1027, 0
  %v1078 = vsel %vm1046, %v1028, 0
  %v1081 = vsel %vm1046, %v1029, 0
  %v1084 = vsel %vm1046, %v1030, 0
  %v1087 = vsel %vm1046, %v1031, 0
  %v1090 = vsel %vm1046, %v1032, 0
  %v1093 = vsel %vm1046, %v1033, 0
  %vm1095 = vcmask 1043456
  %v1097 = vsel %vm1095, %v1038, 0
  %1099 = vmatprep.subr.mxu0 0.0
  %1100 = vmatpush1.msra.mxu0 %v1034
  %1101 = vmatprep.subr.mxu0 0.0
  %1102 = vmatpush1.msra.mxu0 %v1035
  %1103 = vmatprep.subr.mxu0 0.0
  %1104 = vmatpush1.msra.mxu0 %v1036
  %1105 = vmatprep.subr.mxu0 0.0
  %1106 = vmatpush1.msra.mxu0 %v1037
  %1107 = vmatprep.subr.mxu0 0.0
  %1108 = vmatpush1.msra.mxu0 %v1097
  %1109 = vmatprep.subr.mxu0 0.0
  %1110 = vmatpush1.msra.mxu0 0.0
  %1111 = vmatprep.subr.mxu0 0.0
  %1112 = vmatpush1.msra.mxu0 0.0
  %1113 = vmatprep.subr.mxu0 0.0
  %1114 = vmatpush1.msra.mxu0 0.0
  %1115 = vmatprep.subr.mxu0 0.0
  %1116 = vmatpush1.msra.mxu0 0.0
  %1117 = vmatprep.subr.mxu0 0.0
  %1118 = vmatpush1.msra.mxu0 0.0
  %1119 = vmatprep.subr.mxu0 0.0
  %1120 = vmatpush1.msra.mxu0 0.0
  %1121 = vmatprep.subr.mxu0 0.0
  %1122 = vmatpush1.msra.mxu0 0.0
  %1123 = vmatprep.subr.mxu0 0.0
  %1124 = vmatpush1.msra.mxu0 0.0
  %1125 = vmatprep.subr.mxu0 0.0
  %1126 = vmatpush1.msra.mxu0 0.0
  %1127 = vmatprep.subr.mxu0 0.0
  %1128 = vmatpush1.msra.mxu0 0.0
  %1129 = vmatprep.subr.mxu0 0.0
  %1130 = vmatpush1.msra.mxu0 0.0
  %1131 = vmatprep.subr.mxu0 0.0
  %1132 = vmatpush1.msra.mxu0 0.0
  %1133 = vmatprep.subr.mxu0 0.0
  %1134 = vmatpush1.msra.mxu0 0.0
  %1135 = vmatprep.subr.mxu0 0.0
  %1136 = vmatpush1.msra.mxu0 0.0
  %1137 = vmatprep.subr.mxu0 0.0
  %1138 = vmatpush1.msra.mxu0 0.0
  %1139 = vmatprep.subr.mxu0 0.0
  %1140 = vmatpush1.msra.mxu0 0.0
  %1141 = vmatprep.subr.mxu0 0.0
  %1142 = vmatpush1.msra.mxu0 0.0
  %1143 = vmatprep.subr.mxu0 0.0
  %1144 = vmatpush1.msra.mxu0 0.0
  %1145 = vmatprep.subr.mxu0 0.0
  %1146 = vmatpush1.msra.mxu0 0.0
  %1147 = vmatprep.subr.mxu0 0.0
  %1148 = vmatpush1.msra.mxu0 0.0
  %1149 = vmatprep.subr.mxu0 0.0
  %1150 = vmatpush1.msra.mxu0 0.0
  %1151 = vmatprep.subr.mxu0 0.0
  %1152 = vmatpush1.msra.mxu0 0.0
  %1153 = vmatprep.subr.mxu0 0.0
  %1154 = vmatpush1.msra.mxu0 0.0
  %1155 = vmatprep.subr.mxu0 0.0
  %1156 = vmatpush1.msra.mxu0 0.0
  %1157 = vmatprep.subr.mxu0 0.0
  %1158 = vmatpush1.msra.mxu0 0.0
  %1159 = vmatprep.subr.mxu0 0.0
  %1160 = vmatpush1.msra.mxu0 0.0
  %1161 = vmatprep.subr.mxu0 0.0
  %1162 = vmatpush1.msra.mxu0 0.0
  %1163 = vmatprep.mubr.f32.mxu0 0.0
  %1164 = vmatmul.mubr.f32.gmra.mrb[0].mxu0 %v1048
  %v1165 = vpop.f32.mrb[0].mxu0
  %v1166 = vadd.f32 %v1044, %v1165
  %v1167 = vpop.f32.mrb[0].mxu0
  %1168 = vmatprep.mubr.f32.mxu0 0.0
  %1169 = vmatmul.mubr.f32.gmra.mrb[0].mxu0 %v1051
  %v1170 = vpop.f32.mrb[0].mxu0
  %v1171 = vadd.f32 %v1044, %v1170
  %v1172 = vpop.f32.mrb[0].mxu0
  %1173 = vmatprep.mubr.f32.mxu0 0.0
  %1174 = vmatmul.mubr.f32.gmra.mrb[0].mxu0 %v1054
  %v1175 = vpop.f32.mrb[0].mxu0
  %v1176 = vadd.f32 %v1044, %v1175
  %v1177 = vpop.f32.mrb[0].mxu0
  %1178 = vmatprep.mubr.f32.mxu0 0.0
  %1179 = vmatmul.mubr.f32.gmra.mrb[0].mxu0 %v1057
  %v1180 = vpop.f32.mrb[0].mxu0
  %v1181 = vadd.f32 %v1044, %v1180
  %v1182 = vpop.f32.mrb[0].mxu0
  %1183 = vmatprep.mubr.f32.mxu0 0.0
  %1184 = vmatmul.mubr.f32.gmra.mrb[0].mxu0 %v1060
  %v1185 = vpop.f32.mrb[0].mxu0
  %v1186 = vadd.f32 %v1044, %v1185
  %v1187 = vpop.f32.mrb[0].mxu0
  %1188 = vmatprep.mubr.f32.mxu0 0.0
  %1189 = vmatmul.mubr.f32.gmra.mrb[0].mxu0 %v1063
  %v1190 = vpop.f32.mrb[0].mxu0
  %v1191 = vadd.f32 %v1044, %v1190
  %v1192 = vpop.f32.mrb[0].mxu0
  %1193 = vmatprep.mubr.f32.mxu0 0.0
  %1194 = vmatmul.mubr.f32.gmra.mrb[0].mxu0 %v1066
  %v1195 = vpop.f32.mrb[0].mxu0
  %v1196 = vadd.f32 %v1044, %v1195
  %v1197 = vpop.f32.mrb[0].mxu0
  %1198 = vmatprep.mubr.f32.mxu0 0.0
  %1199 = vmatmul.mubr.f32.gmra.mrb[0].mxu0 %v1069
  %v1200 = vpop.f32.mrb[0].mxu0
  %v1201 = vadd.f32 %v1044, %v1200
  %v1202 = vpop.f32.mrb[0].mxu0
  %1203 = vmatprep.mubr.f32.mxu0 0.0
  %1204 = vmatmul.mubr.f32.gmra.mrb[0].mxu0 %v1072
  %v1205 = vpop.f32.mrb[0].mxu0
  %v1206 = vadd.f32 %v1044, %v1205
  %v1207 = vpop.f32.mrb[0].mxu0
  %1208 = vmatprep.mubr.f32.mxu0 0.0
  %1209 = vmatmul.mubr.f32.gmra.mrb[0].mxu0 %v1075
  %v1210 = vpop.f32.mrb[0].mxu0
  %v1211 = vadd.f32 %v1044, %v1210
  %v1212 = vpop.f32.mrb[0].mxu0
  %1213 = vmatprep.mubr.f32.mxu0 0.0
  %1214 = vmatmul.mubr.f32.gmra.mrb[0].mxu0 %v1078
  %v1215 = vpop.f32.mrb[0].mxu0
  %v1216 = vadd.f32 %v1044, %v1215
  %v1217 = vpop.f32.mrb[0].mxu0
  %1218 = vmatprep.mubr.f32.mxu0 0.0
  %1219 = vmatmul.mubr.f32.gmra.mrb[0].mxu0 %v1081
  %v1220 = vpop.f32.mrb[0].mxu0
  %v1221 = vadd.f32 %v1044, %v1220
  %v1222 = vpop.f32.mrb[0].mxu0
  %1223 = vmatprep.mubr.f32.mxu0 0.0
  %1224 = vmatmul.mubr.f32.gmra.mrb[0].mxu0 %v1084
  %v1225 = vpop.f32.mrb[0].mxu0
  %v1226 = vadd.f32 %v1044, %v1225
  %v1227 = vpop.f32.mrb[0].mxu0
  %1228 = vmatprep.mubr.f32.mxu0 0.0
  %1229 = vmatmul.mubr.f32.gmra.mrb[0].mxu0 %v1087
  %v1230 = vpop.f32.mrb[0].mxu0
  %v1231 = vadd.f32 %v1044, %v1230
  %v1232 = vpop.f32.mrb[0].mxu0
  %1233 = vmatprep.mubr.f32.mxu0 0.0
  %1234 = vmatmul.mubr.f32.gmra.mrb[0].mxu0 %v1090
  %v1235 = vpop.f32.mrb[0].mxu0
  %v1236 = vadd.f32 %v1044, %v1235
  %v1237 = vpop.f32.mrb[0].mxu0
  %1238 = vmatprep.mubr.f32.mxu0 0.0
  %1239 = vmatmul.mubr.f32.gmra.mrb[0].mxu0 %v1093
  %v1240 = vpop.f32.mrb[0].mxu0
  %v1241 = vadd.f32 %v1044, %v1240
  %v1242 = vpop.f32.mrb[0].mxu0
  %1243 = vdwg.mxu0
  %v1244 = vmax.f32 %v1166, 0.0
  %v1245 = vmax.f32 %v1171, 0.0
  %v1246 = vmax.f32 %v1176, 0.0
  %v1247 = vmax.f32 %v1181, 0.0
  %v1248 = vmax.f32 %v1186, 0.0
  %v1249 = vmax.f32 %v1191, 0.0
  %v1250 = vmax.f32 %v1196, 0.0
  %v1251 = vmax.f32 %v1201, 0.0
  %v1252 = vmax.f32 %v1206, 0.0
  %v1253 = vmax.f32 %v1211, 0.0
  %v1254 = vmax.f32 %v1216, 0.0
  %v1255 = vmax.f32 %v1221, 0.0
  %v1256 = vmax.f32 %v1226, 0.0
  %v1257 = vmax.f32 %v1231, 0.0
  %v1258 = vmax.f32 %v1236, 0.0
  %v1259 = vmax.f32 %v1241, 0.0
  %vm1260 = vcmask 64512
  %1261 = vst.msk [vmem:[#allocation3] sm:$0xff] %vm1260, 0.0
  %vm1262 = vcmask 58368
  %1263 = vst.msk [vmem:[#allocation3 + $0x8] sm:$0x3] %vm1262, 0.0
  %1264 = vst.msk [vmem:[#allocation3 + $0xa0] sm:$0xff] %vm1260, 0.0
  %1265 = vst.msk [vmem:[#allocation3 + $0xa8] sm:$0x3] %vm1262, 0.0
  %s1266 = scalar_lea.vmem [#allocation3], 144
  %1267 = vst.msk [vmem:[%s1266] sm:$0xff] %vm1260, 0.0
  %1268 = vst.msk [vmem:[%s1266 + $0x8] sm:$0x3] %vm1262, 0.0
  %1269 = vst.msk [vmem:[%s1266 + $0xa0] sm:$0xff] %vm1260, 0.0
  %1270 = vst.msk [vmem:[%s1266 + $0xa8] sm:$0x3] %vm1262, 0.0
  %s1271 = scalar_lea.vmem [#allocation3], 16
  %vm1272 = vcmask 57344
  %1273 = vst.msk [vmem:[%s1271] sm:$0x1] %vm1272, 0.0
  %1274 = vst.msk [vmem:[%s1271 + $0x10] sm:$0x1] %vm1272, 0.0
  %1275 = vst.msk [vmem:[%s1271 + $0x20] sm:$0x1] %vm1272, 0.0
  %1276 = vst.msk [vmem:[%s1271 + $0x30] sm:$0x1] %vm1272, 0.0
  %1277 = vst.msk [vmem:[%s1271 + $0x40] sm:$0x1] %vm1272, 0.0
  %1278 = vst.msk [vmem:[%s1271 + $0x50] sm:$0x1] %vm1272, 0.0
  %1279 = vst.msk [vmem:[%s1271 + $0x60] sm:$0x1] %vm1272, 0.0
  %1280 = vst.msk [vmem:[%s1271 + $0x70] sm:$0x1] %vm1272, 0.0
  %1281 = vst.msk [vmem:[%s1271 + $0xa0] sm:$0x1] %vm1272, 0.0
  %1282 = vst.msk [vmem:[%s1271 + $0xb0] sm:$0x1] %vm1272, 0.0
  %1283 = vst.msk [vmem:[%s1271 + $0xc0] sm:$0x1] %vm1272, 0.0
  %1284 = vst.msk [vmem:[%s1271 + $0xd0] sm:$0x1] %vm1272, 0.0
  %1285 = vst.msk [vmem:[%s1271 + $0xe0] sm:$0x1] %vm1272, 0.0
  %1286 = vst.msk [vmem:[%s1271 + $0xf0] sm:$0x1] %vm1272, 0.0
  %1287 = vst.msk [vmem:[%s1271 + $0x100] sm:$0x1] %vm1272, 0.0
  %1288 = vst.msk [vmem:[%s1271 + $0x110] sm:$0x1] %vm1272, 0.0
  %1289 = vst.msk [vmem:[%s1271 + $0x9] sm:$0x1] %vm1272, 0.0
  %1290 = vst.msk [vmem:[%s1271 + $0x19] sm:$0x1] %vm1272, 0.0
  %1291 = vst.msk [vmem:[%s1271 + $0x29] sm:$0x1] %vm1272, 0.0
  %1292 = vst.msk [vmem:[%s1271 + $0x39] sm:$0x1] %vm1272, 0.0
  %1293 = vst.msk [vmem:[%s1271 + $0x49] sm:$0x1] %vm1272, 0.0
  %1294 = vst.msk [vmem:[%s1271 + $0x59] sm:$0x1] %vm1272, 0.0
  %1295 = vst.msk [vmem:[%s1271 + $0x69] sm:$0x1] %vm1272, 0.0
  %1296 = vst.msk [vmem:[%s1271 + $0x79] sm:$0x1] %vm1272, 0.0
  %1297 = vst.msk [vmem:[%s1271 + $0xa9] sm:$0x1] %vm1272, 0.0
  %1298 = vst.msk [vmem:[%s1271 + $0xb9] sm:$0x1] %vm1272, 0.0
  %1299 = vst.msk [vmem:[%s1271 + $0xc9] sm:$0x1] %vm1272, 0.0
  %1300 = vst.msk [vmem:[%s1271 + $0xd9] sm:$0x1] %vm1272, 0.0
  %1301 = vst.msk [vmem:[%s1271 + $0xe9] sm:$0x1] %vm1272, 0.0
  %1302 = vst.msk [vmem:[%s1271 + $0xf9] sm:$0x1] %vm1272, 0.0
  %1303 = vst.msk [vmem:[%s1271 + $0x109] sm:$0x1] %vm1272, 0.0
  %1304 = vst.msk [vmem:[%s1271 + $0x119] sm:$0x1] %vm1272, 0.0
  %1305 = vst.msk [vmem:[%s1271 + $0x1] sm:$0xff] %vm1260, %v1244
  %1306 = vst.msk [vmem:[%s1271 + $0x11] sm:$0xff] %vm1260, %v1245
  %1307 = vst.msk [vmem:[%s1271 + $0x21] sm:$0xff] %vm1260, %v1246
  %1308 = vst.msk [vmem:[%s1271 + $0x31] sm:$0xff] %vm1260, %v1247
  %1309 = vst.msk [vmem:[%s1271 + $0x41] sm:$0xff] %vm1260, %v1248
  %1310 = vst.msk [vmem:[%s1271 + $0x51] sm:$0xff] %vm1260, %v1249
  %1311 = vst.msk [vmem:[%s1271 + $0x61] sm:$0xff] %vm1260, %v1250
  %1312 = vst.msk [vmem:[%s1271 + $0x71] sm:$0xff] %vm1260, %v1251
  %1313 = vst.msk [vmem:[%s1271 + $0xa1] sm:$0xff] %vm1260, %v1252
  %1314 = vst.msk [vmem:[%s1271 + $0xb1] sm:$0xff] %vm1260, %v1253
  %1315 = vst.msk [vmem:[%s1271 + $0xc1] sm:$0xff] %vm1260, %v1254
  %1316 = vst.msk [vmem:[%s1271 + $0xd1] sm:$0xff] %vm1260, %v1255
  %1317 = vst.msk [vmem:[%s1271 + $0xe1] sm:$0xff] %vm1260, %v1256
  %1318 = vst.msk [vmem:[%s1271 + $0xf1] sm:$0xff] %vm1260, %v1257
  %1319 = vst.msk [vmem:[%s1271 + $0x101] sm:$0xff] %vm1260, %v1258
  %1320 = vst.msk [vmem:[%s1271 + $0x111] sm:$0xff] %vm1260, %v1259
  %v1321 = vld [vmem:[#allocation3] sm:$0xff]
  %v1322 = vld [vmem:[#allocation3 + $0x10] sm:$0xff]
  %v1323 = vld [vmem:[#allocation3 + $0x20] sm:$0xff]
  %v1324 = vld [vmem:[#allocation3 + $0x30] sm:$0xff]
  %v1325 = vld [vmem:[#allocation3 + $0x40] sm:$0xff]
  %v1326 = vld [vmem:[#allocation3 + $0x50] sm:$0xff]
  %v1327 = vld [vmem:[#allocation3 + $0x60] sm:$0xff]
  %v1328 = vld [vmem:[#allocation3 + $0x70] sm:$0xff]
  %v1329 = vld [vmem:[#allocation3 + $0xa0] sm:$0xff]
  %v1330 = vld [vmem:[#allocation3 + $0xb0] sm:$0xff]
  %v1331 = vld [vmem:[#allocation3 + $0xc0] sm:$0xff]
  %v1332 = vld [vmem:[#allocation3 + $0xd0] sm:$0xff]
  %v1333 = vld [vmem:[#allocation3 + $0xe0] sm:$0xff]
  %v1334 = vld [vmem:[#allocation3 + $0xf0] sm:$0xff]
  %v1335 = vld [vmem:[#allocation3 + $0x100] sm:$0xff]
  %v1336 = vld [vmem:[#allocation3 + $0x110] sm:$0xff]
  %1337 = vst.msk [vmem:[#allocation5] sm:$0xff] %vm1260, %v1321
  %1338 = vst.msk [vmem:[#allocation5 + $0x8] sm:$0xff] %vm1260, %v1322
  %1339 = vst.msk [vmem:[#allocation5 + $0x10] sm:$0xff] %vm1260, %v1323
  %1340 = vst.msk [vmem:[#allocation5 + $0x18] sm:$0xff] %vm1260, %v1324
  %1341 = vst.msk [vmem:[#allocation5 + $0x20] sm:$0xff] %vm1260, %v1325
  %1342 = vst.msk [vmem:[#allocation5 + $0x28] sm:$0xff] %vm1260, %v1326
  %1343 = vst.msk [vmem:[#allocation5 + $0x30] sm:$0xff] %vm1260, %v1327
  %1344 = vst.msk [vmem:[#allocation5 + $0x38] sm:$0xff] %vm1260, %v1328
  %1345 = vst.msk [vmem:[#allocation5 + $0x40] sm:$0xff] %vm1260, %v1329
  %1346 = vst.msk [vmem:[#allocation5 + $0x48] sm:$0xff] %vm1260, %v1330
  %1347 = vst.msk [vmem:[#allocation5 + $0x50] sm:$0xff] %vm1260, %v1331
  %1348 = vst.msk [vmem:[#allocation5 + $0x58] sm:$0xff] %vm1260, %v1332
  %1349 = vst.msk [vmem:[#allocation5 + $0x60] sm:$0xff] %vm1260, %v1333
  %1350 = vst.msk [vmem:[#allocation5 + $0x68] sm:$0xff] %vm1260, %v1334
  %1351 = vst.msk [vmem:[#allocation5 + $0x70] sm:$0xff] %vm1260, %v1335
  %1352 = vst.msk [vmem:[#allocation5 + $0x78] sm:$0xff] %vm1260, %v1336
  %v1353 = vld [vmem:[#allocation3 + $0x1] sm:$0xff]
  %v1354 = vld [vmem:[#allocation3 + $0x11] sm:$0xff]
  %v1355 = vld [vmem:[#allocation3 + $0x21] sm:$0xff]
  %v1356 = vld [vmem:[#allocation3 + $0x31] sm:$0xff]
  %v1357 = vld [vmem:[#allocation3 + $0x41] sm:$0xff]
  %v1358 = vld [vmem:[#allocation3 + $0x51] sm:$0xff]
  %v1359 = vld [vmem:[#allocation3 + $0x61] sm:$0xff]
  %v1360 = vld [vmem:[#allocation3 + $0x71] sm:$0xff]
  %v1361 = vld [vmem:[#allocation3 + $0xa1] sm:$0xff]
  %v1362 = vld [vmem:[#allocation3 + $0xb1] sm:$0xff]
  %v1363 = vld [vmem:[#allocation3 + $0xc1] sm:$0xff]
  %v1364 = vld [vmem:[#allocation3 + $0xd1] sm:$0xff]
  %v1365 = vld [vmem:[#allocation3 + $0xe1] sm:$0xff]
  %v1366 = vld [vmem:[#allocation3 + $0xf1] sm:$0xff]
  %v1367 = vld [vmem:[#allocation3 + $0x101] sm:$0xff]
  %v1368 = vld [vmem:[#allocation3 + $0x111] sm:$0xff]
  %1385 = vrot.lane.b32.xlu0 %v1353, 8
  %v1386 = vpop.permute.xlu0 %1385
  %1387 = vrot.lane.b32.xlu0 %v1354, 8
  %v1388 = vpop.permute.xlu0 %1387
  %1389 = vrot.lane.b32.xlu0 %v1355, 8
  %v1390 = vpop.permute.xlu0 %1389
  %1391 = vrot.lane.b32.xlu0 %v1356, 8
  %v1392 = vpop.permute.xlu0 %1391
  %1393 = vrot.lane.b32.xlu0 %v1357, 8
  %v1394 = vpop.permute.xlu0 %1393
  %1395 = vrot.lane.b32.xlu0 %v1358, 8
  %v1396 = vpop.permute.xlu0 %1395
  %1397 = vrot.lane.b32.xlu0 %v1359, 8
  %v1398 = vpop.permute.xlu0 %1397
  %1399 = vrot.lane.b32.xlu0 %v1360, 8
  %v1400 = vpop.permute.xlu0 %1399
  %1401 = vrot.lane.b32.xlu0 %v1361, 8
  %v1402 = vpop.permute.xlu0 %1401
  %1403 = vrot.lane.b32.xlu0 %v1362, 8
  %v1404 = vpop.permute.xlu0 %1403
  %1405 = vrot.lane.b32.xlu0 %v1363, 8
  %v1406 = vpop.permute.xlu0 %1405
  %1407 = vrot.lane.b32.xlu0 %v1364, 8
  %v1408 = vpop.permute.xlu0 %1407
  %1409 = vrot.lane.b32.xlu0 %v1365, 8
  %v1410 = vpop.permute.xlu0 %1409
  %1411 = vrot.lane.b32.xlu0 %v1366, 8
  %v1412 = vpop.permute.xlu0 %1411
  %1413 = vrot.lane.b32.xlu0 %v1367, 8
  %v1414 = vpop.permute.xlu0 %1413
  %1415 = vrot.lane.b32.xlu0 %v1368, 8
  %v1416 = vpop.permute.xlu0 %1415
  %vm1433 = vcmask 130112
  %1434 = vst.msk [vmem:[#allocation5] sm:$0xff] %vm1433, %v1386
  %1435 = vst.msk [vmem:[#allocation5 + $0x8] sm:$0xff] %vm1433, %v1388
  %1436 = vst.msk [vmem:[#allocation5 + $0x10] sm:$0xff] %vm1433, %v1390
  %1437 = vst.msk [vmem:[#allocation5 + $0x18] sm:$0xff] %vm1433, %v1392
  %1438 = vst.msk [vmem:[#allocation5 + $0x20] sm:$0xff] %vm1433, %v1394
  %1439 = vst.msk [vmem:[#allocation5 + $0x28] sm:$0xff] %vm1433, %v1396
  %1440 = vst.msk [vmem:[#allocation5 + $0x30] sm:$0xff] %vm1433, %v1398
  %1441 = vst.msk [vmem:[#allocation5 + $0x38] sm:$0xff] %vm1433, %v1400
  %1442 = vst.msk [vmem:[#allocation5 + $0x40] sm:$0xff] %vm1433, %v1402
  %1443 = vst.msk [vmem:[#allocation5 + $0x48] sm:$0xff] %vm1433, %v1404
  %1444 = vst.msk [vmem:[#allocation5 + $0x50] sm:$0xff] %vm1433, %v1406
  %1445 = vst.msk [vmem:[#allocation5 + $0x58] sm:$0xff] %vm1433, %v1408
  %1446 = vst.msk [vmem:[#allocation5 + $0x60] sm:$0xff] %vm1433, %v1410
  %1447 = vst.msk [vmem:[#allocation5 + $0x68] sm:$0xff] %vm1433, %v1412
  %1448 = vst.msk [vmem:[#allocation5 + $0x70] sm:$0xff] %vm1433, %v1414
  %1449 = vst.msk [vmem:[#allocation5 + $0x78] sm:$0xff] %vm1433, %v1416
  %v1450 = vld [vmem:[#allocation3 + $0x2] sm:$0xff]
  %v1451 = vld [vmem:[#allocation3 + $0x12] sm:$0xff]
  %v1452 = vld [vmem:[#allocation3 + $0x22] sm:$0xff]
  %v1453 = vld [vmem:[#allocation3 + $0x32] sm:$0xff]
  %v1454 = vld [vmem:[#allocation3 + $0x42] sm:$0xff]
  %v1455 = vld [vmem:[#allocation3 + $0x52] sm:$0xff]
  %v1456 = vld [vmem:[#allocation3 + $0x62] sm:$0xff]
  %v1457 = vld [vmem:[#allocation3 + $0x72] sm:$0xff]
  %v1458 = vld [vmem:[#allocation3 + $0xa2] sm:$0xff]
  %v1459 = vld [vmem:[#allocation3 + $0xb2] sm:$0xff]
  %v1460 = vld [vmem:[#allocation3 + $0xc2] sm:$0xff]
  %v1461 = vld [vmem:[#allocation3 + $0xd2] sm:$0xff]
  %v1462 = vld [vmem:[#allocation3 + $0xe2] sm:$0xff]
  %v1463 = vld [vmem:[#allocation3 + $0xf2] sm:$0xff]
  %v1464 = vld [vmem:[#allocation3 + $0x102] sm:$0xff]
  %v1465 = vld [vmem:[#allocation3 + $0x112] sm:$0xff]
  %1482 = vrot.lane.b32.xlu0 %v1450, 16
  %v1483 = vpop.permute.xlu0 %1482
  %1484 = vrot.lane.b32.xlu0 %v1451, 16
  %v1485 = vpop.permute.xlu0 %1484
  %1486 = vrot.lane.b32.xlu0 %v1452, 16
  %v1487 = vpop.permute.xlu0 %1486
  %1488 = vrot.lane.b32.xlu0 %v1453, 16
  %v1489 = vpop.permute.xlu0 %1488
  %1490 = vrot.lane.b32.xlu0 %v1454, 16
  %v1491 = vpop.permute.xlu0 %1490
  %1492 = vrot.lane.b32.xlu0 %v1455, 16
  %v1493 = vpop.permute.xlu0 %1492
  %1494 = vrot.lane.b32.xlu0 %v1456, 16
  %v1495 = vpop.permute.xlu0 %1494
  %1496 = vrot.lane.b32.xlu0 %v1457, 16
  %v1497 = vpop.permute.xlu0 %1496
  %1498 = vrot.lane.b32.xlu0 %v1458, 16
  %v1499 = vpop.permute.xlu0 %1498
  %1500 = vrot.lane.b32.xlu0 %v1459, 16
  %v1501 = vpop.permute.xlu0 %1500
  %1502 = vrot.lane.b32.xlu0 %v1460, 16
  %v1503 = vpop.permute.xlu0 %1502
  %1504 = vrot.lane.b32.xlu0 %v1461, 16
  %v1505 = vpop.permute.xlu0 %1504
  %1506 = vrot.lane.b32.xlu0 %v1462, 16
  %v1507 = vpop.permute.xlu0 %1506
  %1508 = vrot.lane.b32.xlu0 %v1463, 16
  %v1509 = vpop.permute.xlu0 %1508
  %1510 = vrot.lane.b32.xlu0 %v1464, 16
  %v1511 = vpop.permute.xlu0 %1510
  %1512 = vrot.lane.b32.xlu0 %v1465, 16
  %v1513 = vpop.permute.xlu0 %1512
  %vm1530 = vcmask 195712
  %1531 = vst.msk [vmem:[#allocation5] sm:$0xff] %vm1530, %v1483
  %1532 = vst.msk [vmem:[#allocation5 + $0x8] sm:$0xff] %vm1530, %v1485
  %1533 = vst.msk [vmem:[#allocation5 + $0x10] sm:$0xff] %vm1530, %v1487
  %1534 = vst.msk [vmem:[#allocation5 + $0x18] sm:$0xff] %vm1530, %v1489
  %1535 = vst.msk [vmem:[#allocation5 + $0x20] sm:$0xff] %vm1530, %v1491
  %1536 = vst.msk [vmem:[#allocation5 + $0x28] sm:$0xff] %vm1530, %v1493
  %1537 = vst.msk [vmem:[#allocation5 + $0x30] sm:$0xff] %vm1530, %v1495
  %1538 = vst.msk [vmem:[#allocation5 + $0x38] sm:$0xff] %vm1530, %v1497
  %1539 = vst.msk [vmem:[#allocation5 + $0x40] sm:$0xff] %vm1530, %v1499
  %1540 = vst.msk [vmem:[#allocation5 + $0x48] sm:$0xff] %vm1530, %v1501
  %1541 = vst.msk [vmem:[#allocation5 + $0x50] sm:$0xff] %vm1530, %v1503
  %1542 = vst.msk [vmem:[#allocation5 + $0x58] sm:$0xff] %vm1530, %v1505
  %1543 = vst.msk [vmem:[#allocation5 + $0x60] sm:$0xff] %vm1530, %v1507
  %1544 = vst.msk [vmem:[#allocation5 + $0x68] sm:$0xff] %vm1530, %v1509
  %1545 = vst.msk [vmem:[#allocation5 + $0x70] sm:$0xff] %vm1530, %v1511
  %1546 = vst.msk [vmem:[#allocation5 + $0x78] sm:$0xff] %vm1530, %v1513
  %v1547 = vld [vmem:[%s1271] sm:$0xff]
  %v1548 = vld [vmem:[%s1271 + $0x10] sm:$0xff]
  %v1549 = vld [vmem:[%s1271 + $0x20] sm:$0xff]
  %v1550 = vld [vmem:[%s1271 + $0x30] sm:$0xff]
  %v1551 = vld [vmem:[%s1271 + $0x40] sm:$0xff]
  %v1552 = vld [vmem:[%s1271 + $0x50] sm:$0xff]
  %v1553 = vld [vmem:[%s1271 + $0x60] sm:$0xff]
  %v1554 = vld [vmem:[%s1271 + $0x70] sm:$0xff]
  %v1555 = vld [vmem:[%s1271 + $0xa0] sm:$0xff]
  %v1556 = vld [vmem:[%s1271 + $0xb0] sm:$0xff]
  %v1557 = vld [vmem:[%s1271 + $0xc0] sm:$0xff]
  %v1558 = vld [vmem:[%s1271 + $0xd0] sm:$0xff]
  %v1559 = vld [vmem:[%s1271 + $0xe0] sm:$0xff]
  %v1560 = vld [vmem:[%s1271 + $0xf0] sm:$0xff]
  %v1561 = vld [vmem:[%s1271 + $0x100] sm:$0xff]
  %v1562 = vld [vmem:[%s1271 + $0x110] sm:$0xff]
  %1579 = vrot.lane.b32.xlu0 %v1547, 24
  %v1580 = vpop.permute.xlu0 %1579
  %1581 = vrot.lane.b32.xlu0 %v1548, 24
  %v1582 = vpop.permute.xlu0 %1581
  %1583 = vrot.lane.b32.xlu0 %v1549, 24
  %v1584 = vpop.permute.xlu0 %1583
  %1585 = vrot.lane.b32.xlu0 %v1550, 24
  %v1586 = vpop.permute.xlu0 %1585
  %1587 = vrot.lane.b32.xlu0 %v1551, 24
  %v1588 = vpop.permute.xlu0 %1587
  %1589 = vrot.lane.b32.xlu0 %v1552, 24
  %v1590 = vpop.permute.xlu0 %1589
  %1591 = vrot.lane.b32.xlu0 %v1553, 24
  %v1592 = vpop.permute.xlu0 %1591
  %1593 = vrot.lane.b32.xlu0 %v1554, 24
  %v1594 = vpop.permute.xlu0 %1593
  %1595 = vrot.lane.b32.xlu0 %v1555, 24
  %v1596 = vpop.permute.xlu0 %1595
  %1597 = vrot.lane.b32.xlu0 %v1556, 24
  %v1598 = vpop.permute.xlu0 %1597
  %1599 = vrot.lane.b32.xlu0 %v1557, 24
  %v1600 = vpop.permute.xlu0 %1599
  %1601 = vrot.lane.b32.xlu0 %v1558, 24
  %v1602 = vpop.permute.xlu0 %1601
  %1603 = vrot.lane.b32.xlu0 %v1559, 24
  %v1604 = vpop.permute.xlu0 %1603
  %1605 = vrot.lane.b32.xlu0 %v1560, 24
  %v1606 = vpop.permute.xlu0 %1605
  %1607 = vrot.lane.b32.xlu0 %v1561, 24
  %v1608 = vpop.permute.xlu0 %1607
  %1609 = vrot.lane.b32.xlu0 %v1562, 24
  %v1610 = vpop.permute.xlu0 %1609
  %vm1627 = vcmask 261312
  %1628 = vst.msk [vmem:[#allocation5] sm:$0xff] %vm1627, %v1580
  %1629 = vst.msk [vmem:[#allocation5 + $0x8] sm:$0xff] %vm1627, %v1582
  %1630 = vst.msk [vmem:[#allocation5 + $0x10] sm:$0xff] %vm1627, %v1584
  %1631 = vst.msk [vmem:[#allocation5 + $0x18] sm:$0xff] %vm1627, %v1586
  %1632 = vst.msk [vmem:[#allocation5 + $0x20] sm:$0xff] %vm1627, %v1588
  %1633 = vst.msk [vmem:[#allocation5 + $0x28] sm:$0xff] %vm1627, %v1590
  %1634 = vst.msk [vmem:[#allocation5 + $0x30] sm:$0xff] %vm1627, %v1592
  %1635 = vst.msk [vmem:[#allocation5 + $0x38] sm:$0xff] %vm1627, %v1594
  %1636 = vst.msk [vmem:[#allocation5 + $0x40] sm:$0xff] %vm1627, %v1596
  %1637 = vst.msk [vmem:[#allocation5 + $0x48] sm:$0xff] %vm1627, %v1598
  %1638 = vst.msk [vmem:[#allocation5 + $0x50] sm:$0xff] %vm1627, %v1600
  %1639 = vst.msk [vmem:[#allocation5 + $0x58] sm:$0xff] %vm1627, %v1602
  %1640 = vst.msk [vmem:[#allocation5 + $0x60] sm:$0xff] %vm1627, %v1604
  %1641 = vst.msk [vmem:[#allocation5 + $0x68] sm:$0xff] %vm1627, %v1606
  %1642 = vst.msk [vmem:[#allocation5 + $0x70] sm:$0xff] %vm1627, %v1608
  %1643 = vst.msk [vmem:[#allocation5 + $0x78] sm:$0xff] %vm1627, %v1610
  %v1644 = vld [vmem:[%s1271 + $0x1] sm:$0xff]
  %v1645 = vld [vmem:[%s1271 + $0x11] sm:$0xff]
  %v1646 = vld [vmem:[%s1271 + $0x21] sm:$0xff]
  %v1647 = vld [vmem:[%s1271 + $0x31] sm:$0xff]
  %v1648 = vld [vmem:[%s1271 + $0x41] sm:$0xff]
  %v1649 = vld [vmem:[%s1271 + $0x51] sm:$0xff]
  %v1650 = vld [vmem:[%s1271 + $0x61] sm:$0xff]
  %v1651 = vld [vmem:[%s1271 + $0x71] sm:$0xff]
  %v1652 = vld [vmem:[%s1271 + $0xa1] sm:$0xff]
  %v1653 = vld [vmem:[%s1271 + $0xb1] sm:$0xff]
  %v1654 = vld [vmem:[%s1271 + $0xc1] sm:$0xff]
  %v1655 = vld [vmem:[%s1271 + $0xd1] sm:$0xff]
  %v1656 = vld [vmem:[%s1271 + $0xe1] sm:$0xff]
  %v1657 = vld [vmem:[%s1271 + $0xf1] sm:$0xff]
  %v1658 = vld [vmem:[%s1271 + $0x101] sm:$0xff]
  %v1659 = vld [vmem:[%s1271 + $0x111] sm:$0xff]
  %1676 = vrot.lane.b32.xlu0 %v1644, 32
  %v1677 = vpop.permute.xlu0 %1676
  %1678 = vrot.lane.b32.xlu0 %v1645, 32
  %v1679 = vpop.permute.xlu0 %1678
  %1680 = vrot.lane.b32.xlu0 %v1646, 32
  %v1681 = vpop.permute.xlu0 %1680
  %1682 = vrot.lane.b32.xlu0 %v1647, 32
  %v1683 = vpop.permute.xlu0 %1682
  %1684 = vrot.lane.b32.xlu0 %v1648, 32
  %v1685 = vpop.permute.xlu0 %1684
  %1686 = vrot.lane.b32.xlu0 %v1649, 32
  %v1687 = vpop.permute.xlu0 %1686
  %1688 = vrot.lane.b32.xlu0 %v1650, 32
  %v1689 = vpop.permute.xlu0 %1688
  %1690 = vrot.lane.b32.xlu0 %v1651, 32
  %v1691 = vpop.permute.xlu0 %1690
  %1692 = vrot.lane.b32.xlu0 %v1652, 32
  %v1693 = vpop.permute.xlu0 %1692
  %1694 = vrot.lane.b32.xlu0 %v1653, 32
  %v1695 = vpop.permute.xlu0 %1694
  %1696 = vrot.lane.b32.xlu0 %v1654, 32
  %v1697 = vpop.permute.xlu0 %1696
  %1698 = vrot.lane.b32.xlu0 %v1655, 32
  %v1699 = vpop.permute.xlu0 %1698
  %1700 = vrot.lane.b32.xlu0 %v1656, 32
  %v1701 = vpop.permute.xlu0 %1700
  %1702 = vrot.lane.b32.xlu0 %v1657, 32
  %v1703 = vpop.permute.xlu0 %1702
  %1704 = vrot.lane.b32.xlu0 %v1658, 32
  %v1705 = vpop.permute.xlu0 %1704
  %1706 = vrot.lane.b32.xlu0 %v1659, 32
  %v1707 = vpop.permute.xlu0 %1706
  %vm1724 = vcmask 326912
  %1725 = vst.msk [vmem:[#allocation5] sm:$0xff] %vm1724, %v1677
  %1726 = vst.msk [vmem:[#allocation5 + $0x8] sm:$0xff] %vm1724, %v1679
  %1727 = vst.msk [vmem:[#allocation5 + $0x10] sm:$0xff] %vm1724, %v1681
  %1728 = vst.msk [vmem:[#allocation5 + $0x18] sm:$0xff] %vm1724, %v1683
  %1729 = vst.msk [vmem:[#allocation5 + $0x20] sm:$0xff] %vm1724, %v1685
  %1730 = vst.msk [vmem:[#allocation5 + $0x28] sm:$0xff] %vm1724, %v1687
  %1731 = vst.msk [vmem:[#allocation5 + $0x30] sm:$0xff] %vm1724, %v1689
  %1732 = vst.msk [vmem:[#allocation5 + $0x38] sm:$0xff] %vm1724, %v1691
  %1733 = vst.msk [vmem:[#allocation5 + $0x40] sm:$0xff] %vm1724, %v1693
  %1734 = vst.msk [vmem:[#allocation5 + $0x48] sm:$0xff] %vm1724, %v1695
  %1735 = vst.msk [vmem:[#allocation5 + $0x50] sm:$0xff] %vm1724, %v1697
  %1736 = vst.msk [vmem:[#allocation5 + $0x58] sm:$0xff] %vm1724, %v1699
  %1737 = vst.msk [vmem:[#allocation5 + $0x60] sm:$0xff] %vm1724, %v1701
  %1738 = vst.msk [vmem:[#allocation5 + $0x68] sm:$0xff] %vm1724, %v1703
  %1739 = vst.msk [vmem:[#allocation5 + $0x70] sm:$0xff] %vm1724, %v1705
  %1740 = vst.msk [vmem:[#allocation5 + $0x78] sm:$0xff] %vm1724, %v1707
  %v1741 = vld [vmem:[%s1271 + $0x2] sm:$0xff]
  %v1742 = vld [vmem:[%s1271 + $0x12] sm:$0xff]
  %v1743 = vld [vmem:[%s1271 + $0x22] sm:$0xff]
  %v1744 = vld [vmem:[%s1271 + $0x32] sm:$0xff]
  %v1745 = vld [vmem:[%s1271 + $0x42] sm:$0xff]
  %v1746 = vld [vmem:[%s1271 + $0x52] sm:$0xff]
  %v1747 = vld [vmem:[%s1271 + $0x62] sm:$0xff]
  %v1748 = vld [vmem:[%s1271 + $0x72] sm:$0xff]
  %v1749 = vld [vmem:[%s1271 + $0xa2] sm:$0xff]
  %v1750 = vld [vmem:[%s1271 + $0xb2] sm:$0xff]
  %v1751 = vld [vmem:[%s1271 + $0xc2] sm:$0xff]
  %v1752 = vld [vmem:[%s1271 + $0xd2] sm:$0xff]
  %v1753 = vld [vmem:[%s1271 + $0xe2] sm:$0xff]
  %v1754 = vld [vmem:[%s1271 + $0xf2] sm:$0xff]
  %v1755 = vld [vmem:[%s1271 + $0x102] sm:$0xff]
  %v1756 = vld [vmem:[%s1271 + $0x112] sm:$0xff]
  %1773 = vrot.lane.b32.xlu0 %v1741, 40
  %v1774 = vpop.permute.xlu0 %1773
  %1775 = vrot.lane.b32.xlu0 %v1742, 40
  %v1776 = vpop.permute.xlu0 %1775
  %1777 = vrot.lane.b32.xlu0 %v1743, 40
  %v1778 = vpop.permute.xlu0 %1777
  %1779 = vrot.lane.b32.xlu0 %v1744, 40
  %v1780 = vpop.permute.xlu0 %1779
  %1781 = vrot.lane.b32.xlu0 %v1745, 40
  %v1782 = vpop.permute.xlu0 %1781
  %1783 = vrot.lane.b32.xlu0 %v1746, 40
  %v1784 = vpop.permute.xlu0 %1783
  %1785 = vrot.lane.b32.xlu0 %v1747, 40
  %v1786 = vpop.permute.xlu0 %1785
  %1787 = vrot.lane.b32.xlu0 %v1748, 40
  %v1788 = vpop.permute.xlu0 %1787
  %1789 = vrot.lane.b32.xlu0 %v1749, 40
  %v1790 = vpop.permute.xlu0 %1789
  %1791 = vrot.lane.b32.xlu0 %v1750, 40
  %v1792 = vpop.permute.xlu0 %1791
  %1793 = vrot.lane.b32.xlu0 %v1751, 40
  %v1794 = vpop.permute.xlu0 %1793
  %1795 = vrot.lane.b32.xlu0 %v1752, 40
  %v1796 = vpop.permute.xlu0 %1795
  %1797 = vrot.lane.b32.xlu0 %v1753, 40
  %v1798 = vpop.permute.xlu0 %1797
  %1799 = vrot.lane.b32.xlu0 %v1754, 40
  %v1800 = vpop.permute.xlu0 %1799
  %1801 = vrot.lane.b32.xlu0 %v1755, 40
  %v1802 = vpop.permute.xlu0 %1801
  %1803 = vrot.lane.b32.xlu0 %v1756, 40
  %v1804 = vpop.permute.xlu0 %1803
  %vm1821 = vcmask 392512
  %1822 = vst.msk [vmem:[#allocation5] sm:$0xff] %vm1821, %v1774
  %1823 = vst.msk [vmem:[#allocation5 + $0x8] sm:$0xff] %vm1821, %v1776
  %1824 = vst.msk [vmem:[#allocation5 + $0x10] sm:$0xff] %vm1821, %v1778
  %1825 = vst.msk [vmem:[#allocation5 + $0x18] sm:$0xff] %vm1821, %v1780
  %1826 = vst.msk [vmem:[#allocation5 + $0x20] sm:$0xff] %vm1821, %v1782
  %1827 = vst.msk [vmem:[#allocation5 + $0x28] sm:$0xff] %vm1821, %v1784
  %1828 = vst.msk [vmem:[#allocation5 + $0x30] sm:$0xff] %vm1821, %v1786
  %1829 = vst.msk [vmem:[#allocation5 + $0x38] sm:$0xff] %vm1821, %v1788
  %1830 = vst.msk [vmem:[#allocation5 + $0x40] sm:$0xff] %vm1821, %v1790
  %1831 = vst.msk [vmem:[#allocation5 + $0x48] sm:$0xff] %vm1821, %v1792
  %1832 = vst.msk [vmem:[#allocation5 + $0x50] sm:$0xff] %vm1821, %v1794
  %1833 = vst.msk [vmem:[#allocation5 + $0x58] sm:$0xff] %vm1821, %v1796
  %1834 = vst.msk [vmem:[#allocation5 + $0x60] sm:$0xff] %vm1821, %v1798
  %1835 = vst.msk [vmem:[#allocation5 + $0x68] sm:$0xff] %vm1821, %v1800
  %1836 = vst.msk [vmem:[#allocation5 + $0x70] sm:$0xff] %vm1821, %v1802
  %1837 = vst.msk [vmem:[#allocation5 + $0x78] sm:$0xff] %vm1821, %v1804
  %s1838 = scalar_lea.vmem [#allocation3], 32
  %v1839 = vld [vmem:[%s1838] sm:$0xff]
  %v1840 = vld [vmem:[%s1838 + $0x10] sm:$0xff]
  %v1841 = vld [vmem:[%s1838 + $0x20] sm:$0xff]
  %v1842 = vld [vmem:[%s1838 + $0x30] sm:$0xff]
  %v1843 = vld [vmem:[%s1838 + $0x40] sm:$0xff]
  %v1844 = vld [vmem:[%s1838 + $0x50] sm:$0xff]
  %v1845 = vld [vmem:[%s1838 + $0x60] sm:$0xff]
  %v1846 = vld [vmem:[%s1838 + $0x70] sm:$0xff]
  %v1847 = vld [vmem:[%s1838 + $0xa0] sm:$0xff]
  %v1848 = vld [vmem:[%s1838 + $0xb0] sm:$0xff]
  %v1849 = vld [vmem:[%s1838 + $0xc0] sm:$0xff]
  %v1850 = vld [vmem:[%s1838 + $0xd0] sm:$0xff]
  %v1851 = vld [vmem:[%s1838 + $0xe0] sm:$0xff]
  %v1852 = vld [vmem:[%s1838 + $0xf0] sm:$0xff]
  %v1853 = vld [vmem:[%s1838 + $0x100] sm:$0xff]
  %v1854 = vld [vmem:[%s1838 + $0x110] sm:$0xff]
  %1871 = vrot.lane.b32.xlu0 %v1839, 48
  %v1872 = vpop.permute.xlu0 %1871
  %1873 = vrot.lane.b32.xlu0 %v1840, 48
  %v1874 = vpop.permute.xlu0 %1873
  %1875 = vrot.lane.b32.xlu0 %v1841, 48
  %v1876 = vpop.permute.xlu0 %1875
  %1877 = vrot.lane.b32.xlu0 %v1842, 48
  %v1878 = vpop.permute.xlu0 %1877
  %1879 = vrot.lane.b32.xlu0 %v1843, 48
  %v1880 = vpop.permute.xlu0 %1879
  %1881 = vrot.lane.b32.xlu0 %v1844, 48
  %v1882 = vpop.permute.xlu0 %1881
  %1883 = vrot.lane.b32.xlu0 %v1845, 48
  %v1884 = vpop.permute.xlu0 %1883
  %1885 = vrot.lane.b32.xlu0 %v1846, 48
  %v1886 = vpop.permute.xlu0 %1885
  %1887 = vrot.lane.b32.xlu0 %v1847, 48
  %v1888 = vpop.permute.xlu0 %1887
  %1889 = vrot.lane.b32.xlu0 %v1848, 48
  %v1890 = vpop.permute.xlu0 %1889
  %1891 = vrot.lane.b32.xlu0 %v1849, 48
  %v1892 = vpop.permute.xlu0 %1891
  %1893 = vrot.lane.b32.xlu0 %v1850, 48
  %v1894 = vpop.permute.xlu0 %1893
  %1895 = vrot.lane.b32.xlu0 %v1851, 48
  %v1896 = vpop.permute.xlu0 %1895
  %1897 = vrot.lane.b32.xlu0 %v1852, 48
  %v1898 = vpop.permute.xlu0 %1897
  %1899 = vrot.lane.b32.xlu0 %v1853, 48
  %v1900 = vpop.permute.xlu0 %1899
  %1901 = vrot.lane.b32.xlu0 %v1854, 48
  %v1902 = vpop.permute.xlu0 %1901
  %vm1919 = vcmask 458112
  %1920 = vst.msk [vmem:[#allocation5] sm:$0xff] %vm1919, %v1872
  %1921 = vst.msk [vmem:[#allocation5 + $0x8] sm:$0xff] %vm1919, %v1874
  %1922 = vst.msk [vmem:[#allocation5 + $0x10] sm:$0xff] %vm1919, %v1876
  %1923 = vst.msk [vmem:[#allocation5 + $0x18] sm:$0xff] %vm1919, %v1878
  %1924 = vst.msk [vmem:[#allocation5 + $0x20] sm:$0xff] %vm1919, %v1880
  %1925 = vst.msk [vmem:[#allocation5 + $0x28] sm:$0xff] %vm1919, %v1882
  %1926 = vst.msk [vmem:[#allocation5 + $0x30] sm:$0xff] %vm1919, %v1884
  %1927 = vst.msk [vmem:[#allocation5 + $0x38] sm:$0xff] %vm1919, %v1886
  %1928 = vst.msk [vmem:[#allocation5 + $0x40] sm:$0xff] %vm1919, %v1888
  %1929 = vst.msk [vmem:[#allocation5 + $0x48] sm:$0xff] %vm1919, %v1890
  %1930 = vst.msk [vmem:[#allocation5 + $0x50] sm:$0xff] %vm1919, %v1892
  %1931 = vst.msk [vmem:[#allocation5 + $0x58] sm:$0xff] %vm1919, %v1894
  %1932 = vst.msk [vmem:[#allocation5 + $0x60] sm:$0xff] %vm1919, %v1896
  %1933 = vst.msk [vmem:[#allocation5 + $0x68] sm:$0xff] %vm1919, %v1898
  %1934 = vst.msk [vmem:[#allocation5 + $0x70] sm:$0xff] %vm1919, %v1900
  %1935 = vst.msk [vmem:[#allocation5 + $0x78] sm:$0xff] %vm1919, %v1902
  %v1936 = vld [vmem:[%s1838 + $0x1] sm:$0xff]
  %v1937 = vld [vmem:[%s1838 + $0x11] sm:$0xff]
  %v1938 = vld [vmem:[%s1838 + $0x21] sm:$0xff]
  %v1939 = vld [vmem:[%s1838 + $0x31] sm:$0xff]
  %v1940 = vld [vmem:[%s1838 + $0x41] sm:$0xff]
  %v1941 = vld [vmem:[%s1838 + $0x51] sm:$0xff]
  %v1942 = vld [vmem:[%s1838 + $0x61] sm:$0xff]
  %v1943 = vld [vmem:[%s1838 + $0x71] sm:$0xff]
  %v1944 = vld [vmem:[%s1838 + $0xa1] sm:$0xff]
  %v1945 = vld [vmem:[%s1838 + $0xb1] sm:$0xff]
  %v1946 = vld [vmem:[%s1838 + $0xc1] sm:$0xff]
  %v1947 = vld [vmem:[%s1838 + $0xd1] sm:$0xff]
  %v1948 = vld [vmem:[%s1838 + $0xe1] sm:$0xff]
  %v1949 = vld [vmem:[%s1838 + $0xf1] sm:$0xff]
  %v1950 = vld [vmem:[%s1838 + $0x101] sm:$0xff]
  %v1951 = vld [vmem:[%s1838 + $0x111] sm:$0xff]
  %1968 = vrot.lane.b32.xlu0 %v1936, 56
  %v1969 = vpop.permute.xlu0 %1968
  %1970 = vrot.lane.b32.xlu0 %v1937, 56
  %v1971 = vpop.permute.xlu0 %1970
  %1972 = vrot.lane.b32.xlu0 %v1938, 56
  %v1973 = vpop.permute.xlu0 %1972
  %1974 = vrot.lane.b32.xlu0 %v1939, 56
  %v1975 = vpop.permute.xlu0 %1974
  %1976 = vrot.lane.b32.xlu0 %v1940, 56
  %v1977 = vpop.permute.xlu0 %1976
  %1978 = vrot.lane.b32.xlu0 %v1941, 56
  %v1979 = vpop.permute.xlu0 %1978
  %1980 = vrot.lane.b32.xlu0 %v1942, 56
  %v1981 = vpop.permute.xlu0 %1980
  %1982 = vrot.lane.b32.xlu0 %v1943, 56
  %v1983 = vpop.permute.xlu0 %1982
  %1984 = vrot.lane.b32.xlu0 %v1944, 56
  %v1985 = vpop.permute.xlu0 %1984
  %1986 = vrot.lane.b32.xlu0 %v1945, 56
  %v1987 = vpop.permute.xlu0 %1986
  %1988 = vrot.lane.b32.xlu0 %v1946, 56
  %v1989 = vpop.permute.xlu0 %1988
  %1990 = vrot.lane.b32.xlu0 %v1947, 56
  %v1991 = vpop.permute.xlu0 %1990
  %1992 = vrot.lane.b32.xlu0 %v1948, 56
  %v1993 = vpop.permute.xlu0 %1992
  %1994 = vrot.lane.b32.xlu0 %v1949, 56
  %v1995 = vpop.permute.xlu0 %1994
  %1996 = vrot.lane.b32.xlu0 %v1950, 56
  %v1997 = vpop.permute.xlu0 %1996
  %1998 = vrot.lane.b32.xlu0 %v1951, 56
  %v1999 = vpop.permute.xlu0 %1998
  %vm2016 = vcmask 523712
  %2017 = vst.msk [vmem:[#allocation5] sm:$0xff] %vm2016, %v1969
  %2018 = vst.msk [vmem:[#allocation5 + $0x8] sm:$0xff] %vm2016, %v1971
  %2019 = vst.msk [vmem:[#allocation5 + $0x10] sm:$0xff] %vm2016, %v1973
  %2020 = vst.msk [vmem:[#allocation5 + $0x18] sm:$0xff] %vm2016, %v1975
  %2021 = vst.msk [vmem:[#allocation5 + $0x20] sm:$0xff] %vm2016, %v1977
  %2022 = vst.msk [vmem:[#allocation5 + $0x28] sm:$0xff] %vm2016, %v1979
  %2023 = vst.msk [vmem:[#allocation5 + $0x30] sm:$0xff] %vm2016, %v1981
  %2024 = vst.msk [vmem:[#allocation5 + $0x38] sm:$0xff] %vm2016, %v1983
  %2025 = vst.msk [vmem:[#allocation5 + $0x40] sm:$0xff] %vm2016, %v1985
  %2026 = vst.msk [vmem:[#allocation5 + $0x48] sm:$0xff] %vm2016, %v1987
  %2027 = vst.msk [vmem:[#allocation5 + $0x50] sm:$0xff] %vm2016, %v1989
  %2028 = vst.msk [vmem:[#allocation5 + $0x58] sm:$0xff] %vm2016, %v1991
  %2029 = vst.msk [vmem:[#allocation5 + $0x60] sm:$0xff] %vm2016, %v1993
  %2030 = vst.msk [vmem:[#allocation5 + $0x68] sm:$0xff] %vm2016, %v1995
  %2031 = vst.msk [vmem:[#allocation5 + $0x70] sm:$0xff] %vm2016, %v1997
  %2032 = vst.msk [vmem:[#allocation5 + $0x78] sm:$0xff] %vm2016, %v1999
  %v2033 = vld [vmem:[%s1838 + $0x2] sm:$0xff]
  %v2034 = vld [vmem:[%s1838 + $0x12] sm:$0xff]
  %v2035 = vld [vmem:[%s1838 + $0x22] sm:$0xff]
  %v2036 = vld [vmem:[%s1838 + $0x32] sm:$0xff]
  %v2037 = vld [vmem:[%s1838 + $0x42] sm:$0xff]
  %v2038 = vld [vmem:[%s1838 + $0x52] sm:$0xff]
  %v2039 = vld [vmem:[%s1838 + $0x62] sm:$0xff]
  %v2040 = vld [vmem:[%s1838 + $0x72] sm:$0xff]
  %v2041 = vld [vmem:[%s1838 + $0xa2] sm:$0xff]
  %v2042 = vld [vmem:[%s1838 + $0xb2] sm:$0xff]
  %v2043 = vld [vmem:[%s1838 + $0xc2] sm:$0xff]
  %v2044 = vld [vmem:[%s1838 + $0xd2] sm:$0xff]
  %v2045 = vld [vmem:[%s1838 + $0xe2] sm:$0xff]
  %v2046 = vld [vmem:[%s1838 + $0xf2] sm:$0xff]
  %v2047 = vld [vmem:[%s1838 + $0x102] sm:$0xff]
  %v2048 = vld [vmem:[%s1838 + $0x112] sm:$0xff]
  %2065 = vrot.lane.b32.xlu0 %v2033, 64
  %v2066 = vpop.permute.xlu0 %2065
  %2067 = vrot.lane.b32.xlu0 %v2034, 64
  %v2068 = vpop.permute.xlu0 %2067
  %2069 = vrot.lane.b32.xlu0 %v2035, 64
  %v2070 = vpop.permute.xlu0 %2069
  %2071 = vrot.lane.b32.xlu0 %v2036, 64
  %v2072 = vpop.permute.xlu0 %2071
  %2073 = vrot.lane.b32.xlu0 %v2037, 64
  %v2074 = vpop.permute.xlu0 %2073
  %2075 = vrot.lane.b32.xlu0 %v2038, 64
  %v2076 = vpop.permute.xlu0 %2075
  %2077 = vrot.lane.b32.xlu0 %v2039, 64
  %v2078 = vpop.permute.xlu0 %2077
  %2079 = vrot.lane.b32.xlu0 %v2040, 64
  %v2080 = vpop.permute.xlu0 %2079
  %2081 = vrot.lane.b32.xlu0 %v2041, 64
  %v2082 = vpop.permute.xlu0 %2081
  %2083 = vrot.lane.b32.xlu0 %v2042, 64
  %v2084 = vpop.permute.xlu0 %2083
  %2085 = vrot.lane.b32.xlu0 %v2043, 64
  %v2086 = vpop.permute.xlu0 %2085
  %2087 = vrot.lane.b32.xlu0 %v2044, 64
  %v2088 = vpop.permute.xlu0 %2087
  %2089 = vrot.lane.b32.xlu0 %v2045, 64
  %v2090 = vpop.permute.xlu0 %2089
  %2091 = vrot.lane.b32.xlu0 %v2046, 64
  %v2092 = vpop.permute.xlu0 %2091
  %2093 = vrot.lane.b32.xlu0 %v2047, 64
  %v2094 = vpop.permute.xlu0 %2093
  %2095 = vrot.lane.b32.xlu0 %v2048, 64
  %v2096 = vpop.permute.xlu0 %2095
  %vm2113 = vcmask 589312
  %2114 = vst.msk [vmem:[#allocation5] sm:$0xff] %vm2113, %v2066
  %2115 = vst.msk [vmem:[#allocation5 + $0x8] sm:$0xff] %vm2113, %v2068
  %2116 = vst.msk [vmem:[#allocation5 + $0x10] sm:$0xff] %vm2113, %v2070
  %2117 = vst.msk [vmem:[#allocation5 + $0x18] sm:$0xff] %vm2113, %v2072
  %2118 = vst.msk [vmem:[#allocation5 + $0x20] sm:$0xff] %vm2113, %v2074
  %2119 = vst.msk [vmem:[#allocation5 + $0x28] sm:$0xff] %vm2113, %v2076
  %2120 = vst.msk [vmem:[#allocation5 + $0x30] sm:$0xff] %vm2113, %v2078
  %2121 = vst.msk [vmem:[#allocation5 + $0x38] sm:$0xff] %vm2113, %v2080
  %2122 = vst.msk [vmem:[#allocation5 + $0x40] sm:$0xff] %vm2113, %v2082
  %2123 = vst.msk [vmem:[#allocation5 + $0x48] sm:$0xff] %vm2113, %v2084
  %2124 = vst.msk [vmem:[#allocation5 + $0x50] sm:$0xff] %vm2113, %v2086
  %2125 = vst.msk [vmem:[#allocation5 + $0x58] sm:$0xff] %vm2113, %v2088
  %2126 = vst.msk [vmem:[#allocation5 + $0x60] sm:$0xff] %vm2113, %v2090
  %2127 = vst.msk [vmem:[#allocation5 + $0x68] sm:$0xff] %vm2113, %v2092
  %2128 = vst.msk [vmem:[#allocation5 + $0x70] sm:$0xff] %vm2113, %v2094
  %2129 = vst.msk [vmem:[#allocation5 + $0x78] sm:$0xff] %vm2113, %v2096
  %v2130 = vld [vmem:[#allocation5] sm:$0xff]
  %v2131 = vld [vmem:[#allocation5 + $0x8] sm:$0xff]
  %v2132 = vld [vmem:[#allocation5 + $0x10] sm:$0xff]
  %v2133 = vld [vmem:[#allocation5 + $0x18] sm:$0xff]
  %v2134 = vld [vmem:[#allocation5 + $0x20] sm:$0xff]
  %v2135 = vld [vmem:[#allocation5 + $0x28] sm:$0xff]
  %v2136 = vld [vmem:[#allocation5 + $0x30] sm:$0xff]
  %v2137 = vld [vmem:[#allocation5 + $0x38] sm:$0xff]
  %v2138 = vld [vmem:[#allocation5 + $0x40] sm:$0xff]
  %v2139 = vld [vmem:[#allocation5 + $0x48] sm:$0xff]
  %v2140 = vld [vmem:[#allocation5 + $0x50] sm:$0xff]
  %v2141 = vld [vmem:[#allocation5 + $0x58] sm:$0xff]
  %v2142 = vld [vmem:[#allocation5 + $0x60] sm:$0xff]
  %v2143 = vld [vmem:[#allocation5 + $0x68] sm:$0xff]
  %v2144 = vld [vmem:[#allocation5 + $0x70] sm:$0xff]
  %v2145 = vld [vmem:[#allocation5 + $0x78] sm:$0xff]
  %v2146 = vld [vmem:[%s3] sm:$0xff]
  %v2147 = vld [vmem:[%s3 + $0x8] sm:$0xff]
  %v2148 = vld [vmem:[%s3 + $0x10] sm:$0xff]
  %v2149 = vld [vmem:[%s3 + $0x18] sm:$0xff]
  %v2150 = vld [vmem:[%s3 + $0x20] sm:$0xff]
  %v2151 = vld [vmem:[%s3 + $0x28] sm:$0xff]
  %v2152 = vld [vmem:[%s3 + $0x30] sm:$0xff]
  %v2153 = vld [vmem:[%s3 + $0x38] sm:$0xff]
  %v2154 = vld [vmem:[%s3 + $0x40] sm:$0xff]
  %v2155 = vld [vmem:[%s4] sm:$0x1]
  %v2157 = vlaneseq
  %v2158 = vshrl.u32 %v2157, 7
  %v2159 = vsub.s32 0, %v2158
  %v2160 = vrot.slane %v2155, %v2159
  %vm2162 = vcmask 588800
  %v2164 = vsel %vm2162, %v2130, 0
  %v2167 = vsel %vm2162, %v2131, 0
  %v2170 = vsel %vm2162, %v2132, 0
  %v2173 = vsel %vm2162, %v2133, 0
  %v2176 = vsel %vm2162, %v2134, 0
  %v2179 = vsel %vm2162, %v2135, 0
  %v2182 = vsel %vm2162, %v2136, 0
  %v2185 = vsel %vm2162, %v2137, 0
  %v2188 = vsel %vm2162, %v2138, 0
  %v2191 = vsel %vm2162, %v2139, 0
  %v2194 = vsel %vm2162, %v2140, 0
  %v2197 = vsel %vm2162, %v2141, 0
  %v2200 = vsel %vm2162, %v2142, 0
  %v2203 = vsel %vm2162, %v2143, 0
  %v2206 = vsel %vm2162, %v2144, 0
  %v2209 = vsel %vm2162, %v2145, 0
  %2211 = vmatprep.subr.mxu0 0.0
  %2212 = vmatpush1.msra.mxu0 %v2146
  %2213 = vmatprep.subr.mxu0 0.0
  %2214 = vmatpush1.msra.mxu0 %v2147
  %2215 = vmatprep.subr.mxu0 0.0
  %2216 = vmatpush1.msra.mxu0 %v2148
  %2217 = vmatprep.subr.mxu0 0.0
  %2218 = vmatpush1.msra.mxu0 %v2149
  %2219 = vmatprep.subr.mxu0 0.0
  %2220 = vmatpush1.msra.mxu0 %v2150
  %2221 = vmatprep.subr.mxu0 0.0
  %2222 = vmatpush1.msra.mxu0 %v2151
  %2223 = vmatprep.subr.mxu0 0.0
  %2224 = vmatpush1.msra.mxu0 %v2152
  %2225 = vmatprep.subr.mxu0 0.0
  %2226 = vmatpush1.msra.mxu0 %v2153
  %2227 = vmatprep.subr.mxu0 0.0
  %2228 = vmatpush1.msra.mxu0 %v2154
  %2229 = vmatprep.subr.mxu0 0.0
  %2230 = vmatpush1.msra.mxu0 0.0
  %2231 = vmatprep.subr.mxu0 0.0
  %2232 = vmatpush1.msra.mxu0 0.0
  %2233 = vmatprep.subr.mxu0 0.0
  %2234 = vmatpush1.msra.mxu0 0.0
  %2235 = vmatprep.subr.mxu0 0.0
  %2236 = vmatpush1.msra.mxu0 0.0
  %2237 = vmatprep.subr.mxu0 0.0
  %2238 = vmatpush1.msra.mxu0 0.0
  %2239 = vmatprep.subr.mxu0 0.0
  %2240 = vmatpush1.msra.mxu0 0.0
  %2241 = vmatprep.subr.mxu0 0.0
  %2242 = vmatpush1.msra.mxu0 0.0
  %2243 = vmatprep.subr.mxu0 0.0
  %2244 = vmatpush1.msra.mxu0 0.0
  %2245 = vmatprep.subr.mxu0 0.0
  %2246 = vmatpush1.msra.mxu0 0.0
  %2247 = vmatprep.subr.mxu0 0.0
  %2248 = vmatpush1.msra.mxu0 0.0
  %2249 = vmatprep.subr.mxu0 0.0
  %2250 = vmatpush1.msra.mxu0 0.0
  %2251 = vmatprep.subr.mxu0 0.0
  %2252 = vmatpush1.msra.mxu0 0.0
  %2253 = vmatprep.subr.mxu0 0.0
  %2254 = vmatpush1.msra.mxu0 0.0
  %2255 = vmatprep.subr.mxu0 0.0
  %2256 = vmatpush1.msra.mxu0 0.0
  %2257 = vmatprep.subr.mxu0 0.0
  %2258 = vmatpush1.msra.mxu0 0.0
  %2259 = vmatprep.subr.mxu0 0.0
  %2260 = vmatpush1.msra.mxu0 0.0
  %2261 = vmatprep.subr.mxu0 0.0
  %2262 = vmatpush1.msra.mxu0 0.0
  %2263 = vmatprep.subr.mxu0 0.0
  %2264 = vmatpush1.msra.mxu0 0.0
  %2265 = vmatprep.subr.mxu0 0.0
  %2266 = vmatpush1.msra.mxu0 0.0
  %2267 = vmatprep.subr.mxu0 0.0
  %2268 = vmatpush1.msra.mxu0 0.0
  %2269 = vmatprep.subr.mxu0 0.0
  %2270 = vmatpush1.msra.mxu0 0.0
  %2271 = vmatprep.subr.mxu0 0.0
  %2272 = vmatpush1.msra.mxu0 0.0
  %2273 = vmatprep.subr.mxu0 0.0
  %2274 = vmatpush1.msra.mxu0 0.0
  %2275 = vmatprep.mubr.f32.mxu0 0.0
  %2276 = vmatmul.mubr.f32.gmra.mrb[0].mxu0 %v2164
  %v2277 = vpop.f32.mrb[0].mxu0
  %v2278 = vadd.f32 %v2160, %v2277
  %v2279 = vpop.f32.mrb[0].mxu0
  %2280 = vmatprep.mubr.f32.mxu0 0.0
  %2281 = vmatmul.mubr.f32.gmra.mrb[0].mxu0 %v2167
  %v2282 = vpop.f32.mrb[0].mxu0
  %v2283 = vadd.f32 %v2160, %v2282
  %v2284 = vpop.f32.mrb[0].mxu0
  %2285 = vmatprep.mubr.f32.mxu0 0.0
  %2286 = vmatmul.mubr.f32.gmra.mrb[0].mxu0 %v2170
  %v2287 = vpop.f32.mrb[0].mxu0
  %v2288 = vadd.f32 %v2160, %v2287
  %v2289 = vpop.f32.mrb[0].mxu0
  %2290 = vmatprep.mubr.f32.mxu0 0.0
  %2291 = vmatmul.mubr.f32.gmra.mrb[0].mxu0 %v2173
  %v2292 = vpop.f32.mrb[0].mxu0
  %v2293 = vadd.f32 %v2160, %v2292
  %v2294 = vpop.f32.mrb[0].mxu0
  %2295 = vmatprep.mubr.f32.mxu0 0.0
  %2296 = vmatmul.mubr.f32.gmra.mrb[0].mxu0 %v2176
  %v2297 = vpop.f32.mrb[0].mxu0
  %v2298 = vadd.f32 %v2160, %v2297
  %v2299 = vpop.f32.mrb[0].mxu0
  %2300 = vmatprep.mubr.f32.mxu0 0.0
  %2301 = vmatmul.mubr.f32.gmra.mrb[0].mxu0 %v2179
  %v2302 = vpop.f32.mrb[0].mxu0
  %v2303 = vadd.f32 %v2160, %v2302
  %v2304 = vpop.f32.mrb[0].mxu0
  %2305 = vmatprep.mubr.f32.mxu0 0.0
  %2306 = vmatmul.mubr.f32.gmra.mrb[0].mxu0 %v2182
  %v2307 = vpop.f32.mrb[0].mxu0
  %v2308 = vadd.f32 %v2160, %v2307
  %v2309 = vpop.f32.mrb[0].mxu0
  %2310 = vmatprep.mubr.f32.mxu0 0.0
  %2311 = vmatmul.mubr.f32.gmra.mrb[0].mxu0 %v2185
  %v2312 = vpop.f32.mrb[0].mxu0
  %v2313 = vadd.f32 %v2160, %v2312
  %v2314 = vpop.f32.mrb[0].mxu0
  %2315 = vmatprep.mubr.f32.mxu0 0.0
  %2316 = vmatmul.mubr.f32.gmra.mrb[0].mxu0 %v2188
  %v2317 = vpop.f32.mrb[0].mxu0
  %v2318 = vadd.f32 %v2160, %v2317
  %v2319 = vpop.f32.mrb[0].mxu0
  %2320 = vmatprep.mubr.f32.mxu0 0.0
  %2321 = vmatmul.mubr.f32.gmra.mrb[0].mxu0 %v2191
  %v2322 = vpop.f32.mrb[0].mxu0
  %v2323 = vadd.f32 %v2160, %v2322
  %v2324 = vpop.f32.mrb[0].mxu0
  %2325 = vmatprep.mubr.f32.mxu0 0.0
  %2326 = vmatmul.mubr.f32.gmra.mrb[0].mxu0 %v2194
  %v2327 = vpop.f32.mrb[0].mxu0
  %v2328 = vadd.f32 %v2160, %v2327
  %v2329 = vpop.f32.mrb[0].mxu0
  %2330 = vmatprep.mubr.f32.mxu0 0.0
  %2331 = vmatmul.mubr.f32.gmra.mrb[0].mxu0 %v2197
  %v2332 = vpop.f32.mrb[0].mxu0
  %v2333 = vadd.f32 %v2160, %v2332
  %v2334 = vpop.f32.mrb[0].mxu0
  %2335 = vmatprep.mubr.f32.mxu0 0.0
  %2336 = vmatmul.mubr.f32.gmra.mrb[0].mxu0 %v2200
  %v2337 = vpop.f32.mrb[0].mxu0
  %v2338 = vadd.f32 %v2160, %v2337
  %v2339 = vpop.f32.mrb[0].mxu0
  %2340 = vmatprep.mubr.f32.mxu0 0.0
  %2341 = vmatmul.mubr.f32.gmra.mrb[0].mxu0 %v2203
  %v2342 = vpop.f32.mrb[0].mxu0
  %v2343 = vadd.f32 %v2160, %v2342
  %v2344 = vpop.f32.mrb[0].mxu0
  %2345 = vmatprep.mubr.f32.mxu0 0.0
  %2346 = vmatmul.mubr.f32.gmra.mrb[0].mxu0 %v2206
  %v2347 = vpop.f32.mrb[0].mxu0
  %v2348 = vadd.f32 %v2160, %v2347
  %v2349 = vpop.f32.mrb[0].mxu0
  %2350 = vmatprep.mubr.f32.mxu0 0.0
  %2351 = vmatmul.mubr.f32.gmra.mrb[0].mxu0 %v2209
  %v2352 = vpop.f32.mrb[0].mxu0
  %v2353 = vadd.f32 %v2160, %v2352
  %v2354 = vpop.f32.mrb[0].mxu0
  %2355 = vdwg.mxu0
  %v2356 = vmax.f32 %v2278, 0.0
  %v2357 = vmax.f32 %v2283, 0.0
  %v2358 = vmax.f32 %v2288, 0.0
  %v2359 = vmax.f32 %v2293, 0.0
  %v2360 = vmax.f32 %v2298, 0.0
  %v2361 = vmax.f32 %v2303, 0.0
  %v2362 = vmax.f32 %v2308, 0.0
  %v2363 = vmax.f32 %v2313, 0.0
  %v2364 = vmax.f32 %v2318, 0.0
  %v2365 = vmax.f32 %v2323, 0.0
  %v2366 = vmax.f32 %v2328, 0.0
  %v2367 = vmax.f32 %v2333, 0.0
  %v2368 = vmax.f32 %v2338, 0.0
  %v2369 = vmax.f32 %v2343, 0.0
  %v2370 = vmax.f32 %v2348, 0.0
  %v2371 = vmax.f32 %v2353, 0.0
  %2372 = vst.msk [vmem:[%s5] sm:$0xff] %vm1260, %v2356
  %2373 = vst.msk [vmem:[%s5 + $0x8] sm:$0xff] %vm1260, %v2357
  %2374 = vst.msk [vmem:[%s5 + $0x10] sm:$0xff] %vm1260, %v2358
  %2375 = vst.msk [vmem:[%s5 + $0x18] sm:$0xff] %vm1260, %v2359
  %2376 = vst.msk [vmem:[%s5 + $0x20] sm:$0xff] %vm1260, %v2360
  %2377 = vst.msk [vmem:[%s5 + $0x28] sm:$0xff] %vm1260, %v2361
  %2378 = vst.msk [vmem:[%s5 + $0x30] sm:$0xff] %vm1260, %v2362
  %2379 = vst.msk [vmem:[%s5 + $0x38] sm:$0xff] %vm1260, %v2363
  %2380 = vst.msk [vmem:[%s5 + $0x40] sm:$0xff] %vm1260, %v2364
  %2381 = vst.msk [vmem:[%s5 + $0x48] sm:$0xff] %vm1260, %v2365
  %2382 = vst.msk [vmem:[%s5 + $0x50] sm:$0xff] %vm1260, %v2366
  %2383 = vst.msk [vmem:[%s5 + $0x58] sm:$0xff] %vm1260, %v2367
  %2384 = vst.msk [vmem:[%s5 + $0x60] sm:$0xff] %vm1260, %v2368
  %2385 = vst.msk [vmem:[%s5 + $0x68] sm:$0xff] %vm1260, %v2369
  %2386 = vst.msk [vmem:[%s5 + $0x70] sm:$0xff] %vm1260, %v2370
  %2387 = vst.msk [vmem:[%s5 + $0x78] sm:$0xff] %vm1260, %v2371
  // Predicated region
  $region22: #{contract_forward.1} parent=0 // pred_check
    _
  $region23: #{contract_forward.1} parent=0 // pred_check_branch
    %2389 = sbr.rel (0) target = $region25
  $region24: #{contract_forward.1} parent=0 // pred_region
    _
  $region25: #{contract_forward.1} parent=0 // pred_fallthru
    _
  // Predicated region
  $region26: #{contract_forward.1} parent=0 // pred_check
    _
  $region27: #{contract_forward.1} parent=0 // pred_check_branch
    %2391 = sbr.rel (0) target = $region29
  $region28: #{contract_forward.1} parent=0 // pred_region
    _
  $region29: #{contract_forward.1} parent=0 // pred_fallthru
    _

</llo_original>
